<compile_context>
chip_gen: v6e
topology: v6e:2x2x1
jax: 0.10.0
libtpu: 0.0.40
codegen_flags: <defaults>
</compile_context>

<pallas_src>
import jax
import jax.numpy as jnp
from jax import lax
from jax.experimental import pallas as pl
from jax.experimental.pallas import tpu as pltpu

K_TOP = 4  # torch.topk k=4 in the reference module


# ----------------------------------------------------------------------------
# Tile pickers
# ----------------------------------------------------------------------------
def _pick_row_tile(n_rows, n_lanes, target=256, scratch_budget_bytes=28 << 20):
    """Largest row tile that divides n_rows, is a multiple of 8 (layout rule)
    unless it equals n_rows, and keeps ~7 live f32 copies of a (TR, n_lanes)
    block (2x2 double-buffered inputs + in-kernel temporaries) under budget."""
    cap = max(8, scratch_budget_bytes // (7 * 4 * max(n_lanes, 1)))
    target = max(8, min(target, cap))
    if n_rows <= target:
        return n_rows
    start = target - (target % 8)
    for t in range(start, 7, -8):
        if n_rows % t == 0:
            return t
    return n_rows  # no multiple-of-8 divisor; fall back to a single tile


def _pick_lane_tile(n, target=2048):
    if n <= target:
        return n
    start = target - (target % 128)
    for t in range(start, 127, -128):
        if n % t == 0:
            return t
    return n


# ----------------------------------------------------------------------------
# Matcher.forward kernel: grid = (batch, row-tile). Output is a max-accumulator.
# ----------------------------------------------------------------------------
def matcher_kernel(isim_ref, psim_ref, seg_ref, out_ref):
    r = pl.program_id(1)

    isim = isim_ref[0]   # (TR, N) init_sim rows (reference pixels) for this tile
    psim = psim_ref[0]   # (TR, N) prev_sim rows
    seg = seg_ref[0]     # (TR, 4): [init_bg, init_fg, prev_bg, prev_fg]

    n_lanes = psim.shape[1]
    # Hoisted MXU helper: tie counts via (0/1)-bf16 matmul with f32 accumulation.
    ones_col = jnp.ones((n_lanes, 1), jnp.bfloat16)

    # ---- global branch: row-scaled max over reference rows ----
    g_bg = jnp.max(isim * seg[:, 0:1], axis=0, keepdims=True)   # (1, N)
    g_fg = jnp.max(isim * seg[:, 1:2], axis=0, keepdims=True)   # (1, N)

    # ---- local branch (top-k cut per row, replace-below-cut, column max) ----
    def local_branch(w):                          # w: (TR, 1) per-row scale
        # After row tiling the (TR, N) temp lives comfortably in VMEM;
        # no full (N, N) materialization.
        s = psim * w                              # (TR, N)
        row_min = jnp.min(s, axis=1, keepdims=True)   # (TR, 1)
        cut = jnp.max(s, axis=1, keepdims=True)       # (TR, 1)  start at row max
        # Walk down distinct values until >= K_TOP entries are >= cut; this
        # reproduces torch.topk(k=4)'s 4th value including tie multiplicity.
        # The f32 count is exact for N < 2**24.
        for _ in range(K_TOP - 1):
            ge = s >= cut                             # one mask, two reductions
            cnt = jnp.dot(ge.astype(jnp.bfloat16), ones_col,
                          preferred_element_type=jnp.float32)        # (TR, 1) on MXU
            nxt = jnp.max(jnp.where(ge, -jnp.inf, s), axis=1, keepdims=True)
            cut = jnp.where(cnt >= K_TOP, cut, nxt)
        # Fuse "replace strictly-below-cut with row min" into the column max.
        return jnp.max(jnp.where(s < cut, row_min, s), axis=0, keepdims=True)

    l_bg = local_branch(seg[:, 2:3])
    l_fg = local_branch(seg[:, 3:4])

    new = jnp.concatenate([g_bg, g_fg, l_bg, l_fg], axis=0)     # (4, N)

    @pl.when(r == 0)
    def _():
        out_ref[0] = new.astype(out_ref.dtype)

    @pl.when(r > 0)
    def _():
        out_ref[0] = jnp.maximum(out_ref[0], new.astype(out_ref.dtype))


def matcher_forward(init_sim, prev_sim, init_seg, prev_seg, *, row_tile=256):
    """init_sim/prev_sim: (B, H*W, H, W); init_seg/prev_seg: (B, 2, H, W)."""
    B, N, H, W = init_sim.shape
    HW = H * W
    assert N == HW, "init_sim must be (B, H*W, H, W)"

    f32 = jnp.float32
    # TODO(synk): optionally store the sims as bf16 in HBM (cast to f32 per tile
    # in-kernel) to halve HBM traffic on v5e/v6e; kept f32 here to preserve the
    # module's f32 numerics exactly.
    isim = init_sim.reshape(B, N, HW).astype(f32)
    psim = prev_sim.reshape(B, N, HW).astype(f32)
    iseg = init_seg.reshape(B, 2, HW).transpose(0, 2, 1)
    pseg = prev_seg.reshape(B, 2, HW).transpose(0, 2, 1)
    seg = jnp.concatenate([iseg, pseg], axis=-1).astype(f32)   # (B, N, 4)

    TR = _pick_row_tile(N, HW, target=row_tile)
    n_row_tiles = N // TR

    # Explicit VMEM budget for the chosen tile (double-buffered inputs,
    # resident output accumulator, in-kernel temporaries, headroom),
    # capped at 48 MiB so it also fits v7x's 64 MiB physical VMEM per TC.
    sim_block = TR * HW * 4
    vmem_budget = (2 * 2 * sim_block          # isim + psim, 2 buffers each
                   + 2 * TR * 4 * 4           # merged seg block, 2 buffers
                   + 4 * HW * 4               # resident (4, N) output
                   + 3 * sim_block            # s / mask / reduction temps
                   + (4 << 20))               # headroom
    vmem_limit = int(min(max(vmem_budget, 32 << 20), 48 << 20))

    out = pl.pallas_call(
        matcher_kernel,
        out_shape=jax.ShapeDtypeStruct((B, 4, HW), jnp.float32),
        grid_spec=pltpu.PrefetchScalarGridSpec(
            num_scalar_prefetch=0,
            grid=(B, n_row_tiles),
            in_specs=[
                pl.BlockSpec((1, TR, HW), lambda b, r: (b, r, 0)),
                pl.BlockSpec((1, TR, HW), lambda b, r: (b, r, 0)),
                pl.BlockSpec((1, TR, 4), lambda b, r: (b, r, 0)),
            ],
            out_specs=pl.BlockSpec((1, 4, HW), lambda b, r: (b, 0, 0)),
        ),
        compiler_params=pltpu.CompilerParams(
            dimension_semantics=("parallel", "arbitrary"),
            vmem_limit_bytes=vmem_limit,
        ),
    )(isim, psim, seg)

    return out.reshape(B, 4, H, W)


# ----------------------------------------------------------------------------
# Matcher.get_norm_key: 1x1 conv (matmul over channels) + L2 channel norm.
# ----------------------------------------------------------------------------
def normkey_kernel(x_ref, w_ref, b_ref, out_ref):
    x = x_ref[0]            # (Cin, TN)
    w = w_ref[...]          # (Cout, Cin)
    b = b_ref[...]          # (Cout, 1)
    key = jnp.dot(w, x, preferred_element_type=jnp.float32) + b     # (Cout, TN)
    inv = lax.rsqrt(jnp.sum(key * key, axis=0, keepdims=True))      # EUP rsqrt
    out_ref[0] = (key * inv).astype(out_ref.dtype)


def get_norm_key(feats, weight, bias, *, lane_tile=2048):
    """feats: (B, Cin, H, W); weight: (Cout, Cin); bias: (Cout,)."""
    B, Cin, H, W = feats.shape
    Cout = weight.shape[0]
    N = H * W
    x = feats.reshape(B, Cin, N).astype(jnp.float32)
    b2 = bias.reshape(Cout, 1).astype(jnp.float32)
    TN = _pick_lane_tile(N, lane_tile)

    out = pl.pallas_call(
        normkey_kernel,
        out_shape=jax.ShapeDtypeStruct((B, Cout, N), jnp.float32),
        grid_spec=pltpu.PrefetchScalarGridSpec(
            num_scalar_prefetch=0,
            grid=(B, N // TN),
            in_specs=[
                pl.BlockSpec((1, Cin, TN), lambda b, n: (b, 0, n)),
                pl.BlockSpec((Cout, Cin), lambda b, n: (0, 0)),
                pl.BlockSpec((Cout, 1), lambda b, n: (0, 0)),
            ],
            out_specs=pl.BlockSpec((1, Cout, TN), lambda b, n: (b, 0, n)),
        ),
        compiler_params=pltpu.CompilerParams(
            dimension_semantics=("parallel", "parallel"),
            vmem_limit_bytes=32 << 20,
        ),
    )(x, weight.astype(jnp.float32), b2)

    return out.reshape(B, Cout, H, W)


# ----------------------------------------------------------------------------
# Pure-JAX references (mirror the PyTorch forward exactly) for verification.
# ----------------------------------------------------------------------------
def matcher_forward_ref(init_sim, prev_sim, init_seg, prev_seg):
    B, N, H, W = init_sim.shape
    HW = H * W
    isim = init_sim.reshape(B, N, HW)
    psim = prev_sim.reshape(B, N, HW)
    iseg = init_seg.reshape(B, 2, HW)
    pseg = prev_seg.reshape(B, 2, HW)

    outs = []
    for c in range(2):
        s = isim * iseg[:, c][:, :, None]
        outs.append(jnp.max(s, axis=1, keepdims=True))
    for c in range(2):
        s = psim * pseg[:, c][:, :, None]
        topk = jax.lax.top_k(s, K_TOP)[0]
        cut = topk[:, :, -1:]
        rmin = jnp.min(s, axis=2, keepdims=True)
        s = jnp.where(s < cut, rmin, s)
        outs.append(jnp.max(s, axis=1, keepdims=True))
    return jnp.concatenate(outs, axis=1).reshape(B, 4, H, W)


def get_norm_key_ref(feats, weight, bias):
    key = jnp.einsum("oc,bchw->bohw", weight, feats) + bias[None, :, None, None]
    norm = jnp.sqrt(jnp.sum(key * key, axis=1, keepdims=True))
    return key / norm


if __name__ == "__main__":
    B, H, W = 2, 8, 8
    N = H * W
    indim, outdim = 8, 8

    key = jax.random.PRNGKey(0)
    k1, k2, k3, k4, k5, k6 = jax.random.split(key, 6)

    # Similarity volumes: (B, H*W, H, W)
    init_sim = jax.random.normal(k1, (B, N, H, W), dtype=jnp.float32)
    prev_sim = jax.random.normal(k2, (B, N, H, W), dtype=jnp.float32)

    # Segmentation probabilities (bg/fg): (B, 2, H, W)
    init_seg = jax.nn.softmax(jax.random.normal(k3, (B, 2, H, W), jnp.float32), axis=1)
    prev_seg = jax.nn.softmax(jax.random.normal(k4, (B, 2, H, W), jnp.float32), axis=1)

    # Conv(indim, outdim, 1, 1, 0) parameters: kaiming_uniform_ weight, zero bias.
    fan_in = indim * 1 * 1
    bound = (6.0 / fan_in) ** 0.5
    conv_w = jax.random.uniform(k5, (outdim, indim), jnp.float32, -bound, bound)
    conv_b = jnp.zeros((outdim,), jnp.float32)

    feats = jax.random.normal(k6, (B, indim, H, W), dtype=jnp.float32)

    total_ref = matcher_forward_ref(init_sim, prev_sim, init_seg, prev_seg)

    # --- forward (Pallas), single row tile ---
    total1 = jax.block_until_ready(
        matcher_forward(init_sim, prev_sim, init_seg, prev_seg))
    assert total1.shape == (B, 4, H, W)
    assert jnp.allclose(total1, total_ref, atol=1e-5, rtol=1e-5), \
        "matcher forward mismatch (single tile)"

    # --- forward (Pallas), forced row tiling (exercises first-write + max accum) ---
    total2 = jax.block_until_ready(
        matcher_forward(init_sim, prev_sim, init_seg, prev_seg, row_tile=16))
    assert jnp.allclose(total2, total_ref, atol=1e-5, rtol=1e-5), \
        "matcher forward mismatch (row-tiled)"

    # --- get_norm_key (Pallas) vs reference ---
    nkey = jax.block_until_ready(get_norm_key(feats, conv_w, conv_b))
    nkey_ref = get_norm_key_ref(feats, conv_w, conv_b)
    assert nkey.shape == (B, outdim, H, W)
    assert jnp.allclose(nkey, nkey_ref, atol=1e-5, rtol=1e-5), "get_norm_key mismatch"

    print("KERNEL_OK")
</pallas_src>

<mosaic_0001>
module attributes {stable_mosaic.version = 11 : i64} {
  func.func @matcher_kernel(%arg0: i32, %arg1: i32, %arg2: memref<1x64x64xf32, #tpu.memory_space<vmem>>, %arg3: memref<1x64x64xf32, #tpu.memory_space<vmem>>, %arg4: memref<1x64x4xf32, #tpu.memory_space<vmem>>, %arg5: memref<1x4x64xf32, #tpu.memory_space<vmem>>) attributes {dimension_semantics = [#tpu.dimension_semantics<parallel>, #tpu.dimension_semantics<arbitrary>], iteration_bounds = array<i64: 2, 1>, scalar_prefetch = 0 : i64, scratch_operands = 0 : i64, tpu.core_type = #tpu.core_type<tc>, window_params = [{transform_indices = @transform_0, window_bounds = array<i64: 1, 64, 64>}, {transform_indices = @transform_1, window_bounds = array<i64: 1, 64, 64>}, {transform_indices = @transform_2, window_bounds = array<i64: 1, 64, 4>}, {transform_indices = @transform_3, window_bounds = array<i64: 1, 4, 64>}]} {
    %c0 = arith.constant 0 : index
    %c0_0 = arith.constant 0 : index
    %c0_1 = arith.constant 0 : index
    %0 = vector.load %arg2[%c0, %c0_0, %c0_1] : memref<1x64x64xf32, #tpu.memory_space<vmem>>, vector<1x64x64xf32>
    %1 = vector.shape_cast %0 : vector<1x64x64xf32> to vector<64x64xf32>
    %c0_2 = arith.constant 0 : index
    %c0_3 = arith.constant 0 : index
    %c0_4 = arith.constant 0 : index
    %2 = vector.load %arg3[%c0_2, %c0_3, %c0_4] : memref<1x64x64xf32, #tpu.memory_space<vmem>>, vector<1x64x64xf32>
    %3 = vector.shape_cast %2 : vector<1x64x64xf32> to vector<64x64xf32>
    %c0_5 = arith.constant 0 : index
    %c0_6 = arith.constant 0 : index
    %c0_7 = arith.constant 0 : index
    %4 = vector.load %arg4[%c0_5, %c0_6, %c0_7] : memref<1x64x4xf32, #tpu.memory_space<vmem>>, vector<1x64x4xf32>
    %5 = vector.shape_cast %4 : vector<1x64x4xf32> to vector<64x4xf32>
    %cst = arith.constant 1.000000e+00 : bf16
    %6 = vector.broadcast %cst : bf16 to vector<64x1xbf16>
    %7 = vector.extract_strided_slice %5 {offsets = [0, 0], sizes = [64, 1], strides = [1, 1]} : vector<64x4xf32> to vector<64x1xf32>
    %8 = vector.broadcast %7 : vector<64x1xf32> to vector<64x64xf32>
    %9 = arith.mulf %1, %8 : vector<64x64xf32>
    %cst_8 = arith.constant dense<0xFF800000> : vector<64xf32>
    %10 = vector.multi_reduction <maximumf>, %9, %cst_8 [0] : vector<64x64xf32> to vector<64xf32>
    %11 = vector.shape_cast %10 : vector<64xf32> to vector<1x64xf32>
    %12 = vector.extract_strided_slice %5 {offsets = [0, 1], sizes = [64, 1], strides = [1, 1]} : vector<64x4xf32> to vector<64x1xf32>
    %13 = vector.broadcast %12 : vector<64x1xf32> to vector<64x64xf32>
    %14 = arith.mulf %1, %13 : vector<64x64xf32>
    %cst_9 = arith.constant dense<0xFF800000> : vector<64xf32>
    %15 = vector.multi_reduction <maximumf>, %14, %cst_9 [0] : vector<64x64xf32> to vector<64xf32>
    %16 = vector.shape_cast %15 : vector<64xf32> to vector<1x64xf32>
    %17 = vector.extract_strided_slice %5 {offsets = [0, 2], sizes = [64, 1], strides = [1, 1]} : vector<64x4xf32> to vector<64x1xf32>
    %18 = vector.broadcast %17 : vector<64x1xf32> to vector<64x64xf32>
    %19 = arith.mulf %3, %18 : vector<64x64xf32>
    %cst_10 = arith.constant dense<0x7F800000> : vector<64xf32>
    %20 = vector.multi_reduction <minimumf>, %19, %cst_10 [1] : vector<64x64xf32> to vector<64xf32>
    %21 = vector.shape_cast %20 : vector<64xf32> to vector<64x1xf32>
    %cst_11 = arith.constant dense<0xFF800000> : vector<64xf32>
    %22 = vector.multi_reduction <maximumf>, %19, %cst_11 [1] : vector<64x64xf32> to vector<64xf32>
    %23 = vector.shape_cast %22 : vector<64xf32> to vector<64x1xf32>
    %24 = vector.broadcast %23 : vector<64x1xf32> to vector<64x64xf32>
    %25 = arith.cmpf oge, %19, %24 : vector<64x64xf32>
    %26 = arith.extui %25 : vector<64x64xi1> to vector<64x64xi32>
    %27 = arith.sitofp %26 : vector<64x64xi32> to vector<64x64xf32>
    %28 = arith.truncf %27 : vector<64x64xf32> to vector<64x64xbf16>
    %cst_12 = arith.constant dense<0.000000e+00> : vector<64x1xf32>
    %29 = tpu.matmul %28, %6, %cst_12 {dimension_numbers = #tpu.dot_dimension_numbers<[1], [0], [0], [1], [0, 0, 1, 1], [], []>} : vector<64x64xbf16>, vector<64x1xbf16>, vector<64x1xf32> -> vector<64x1xf32>
    %cst_13 = arith.constant 0xFF800000 : f32
    %30 = vector.broadcast %cst_13 : f32 to vector<64x64xf32>
    %31 = arith.select %25, %30, %19 : vector<64x64xi1>, vector<64x64xf32>
    %cst_14 = arith.constant dense<0xFF800000> : vector<64xf32>
    %32 = vector.multi_reduction <maximumf>, %31, %cst_14 [1] : vector<64x64xf32> to vector<64xf32>
    %33 = vector.shape_cast %32 : vector<64xf32> to vector<64x1xf32>
    %cst_15 = arith.constant 4.000000e+00 : f32
    %34 = vector.broadcast %cst_15 : f32 to vector<64x1xf32>
    %35 = arith.cmpf oge, %29, %34 : vector<64x1xf32>
    %36 = arith.select %35, %23, %33 : vector<64x1xi1>, vector<64x1xf32>
    %37 = vector.broadcast %36 : vector<64x1xf32> to vector<64x64xf32>
    %38 = arith.cmpf oge, %19, %37 : vector<64x64xf32>
    %39 = arith.extui %38 : vector<64x64xi1> to vector<64x64xi32>
    %40 = arith.sitofp %39 : vector<64x64xi32> to vector<64x64xf32>
    %41 = arith.truncf %40 : vector<64x64xf32> to vector<64x64xbf16>
    %cst_16 = arith.constant dense<0.000000e+00> : vector<64x1xf32>
    %42 = tpu.matmul %41, %6, %cst_16 {dimension_numbers = #tpu.dot_dimension_numbers<[1], [0], [0], [1], [0, 0, 1, 1], [], []>} : vector<64x64xbf16>, vector<64x1xbf16>, vector<64x1xf32> -> vector<64x1xf32>
    %cst_17 = arith.constant 0xFF800000 : f32
    %43 = vector.broadcast %cst_17 : f32 to vector<64x64xf32>
    %44 = arith.select %38, %43, %19 : vector<64x64xi1>, vector<64x64xf32>
    %cst_18 = arith.constant dense<0xFF800000> : vector<64xf32>
    %45 = vector.multi_reduction <maximumf>, %44, %cst_18 [1] : vector<64x64xf32> to vector<64xf32>
    %46 = vector.shape_cast %45 : vector<64xf32> to vector<64x1xf32>
    %cst_19 = arith.constant 4.000000e+00 : f32
    %47 = vector.broadcast %cst_19 : f32 to vector<64x1xf32>
    %48 = arith.cmpf oge, %42, %47 : vector<64x1xf32>
    %49 = arith.select %48, %36, %46 : vector<64x1xi1>, vector<64x1xf32>
    %50 = vector.broadcast %49 : vector<64x1xf32> to vector<64x64xf32>
    %51 = arith.cmpf oge, %19, %50 : vector<64x64xf32>
    %52 = arith.extui %51 : vector<64x64xi1> to vector<64x64xi32>
    %53 = arith.sitofp %52 : vector<64x64xi32> to vector<64x64xf32>
    %54 = arith.truncf %53 : vector<64x64xf32> to vector<64x64xbf16>
    %cst_20 = arith.constant dense<0.000000e+00> : vector<64x1xf32>
    %55 = tpu.matmul %54, %6, %cst_20 {dimension_numbers = #tpu.dot_dimension_numbers<[1], [0], [0], [1], [0, 0, 1, 1], [], []>} : vector<64x64xbf16>, vector<64x1xbf16>, vector<64x1xf32> -> vector<64x1xf32>
    %cst_21 = arith.constant 0xFF800000 : f32
    %56 = vector.broadcast %cst_21 : f32 to vector<64x64xf32>
    %57 = arith.select %51, %56, %19 : vector<64x64xi1>, vector<64x64xf32>
    %cst_22 = arith.constant dense<0xFF800000> : vector<64xf32>
    %58 = vector.multi_reduction <maximumf>, %57, %cst_22 [1] : vector<64x64xf32> to vector<64xf32>
    %59 = vector.shape_cast %58 : vector<64xf32> to vector<64x1xf32>
    %cst_23 = arith.constant 4.000000e+00 : f32
    %60 = vector.broadcast %cst_23 : f32 to vector<64x1xf32>
    %61 = arith.cmpf oge, %55, %60 : vector<64x1xf32>
    %62 = arith.select %61, %49, %59 : vector<64x1xi1>, vector<64x1xf32>
    %63 = vector.broadcast %62 : vector<64x1xf32> to vector<64x64xf32>
    %64 = arith.cmpf olt, %19, %63 : vector<64x64xf32>
    %65 = vector.shape_cast %21 : vector<64x1xf32> to vector<64x1xf32>
    %66 = vector.broadcast %65 : vector<64x1xf32> to vector<64x64xf32>
    %67 = arith.select %64, %66, %19 : vector<64x64xi1>, vector<64x64xf32>
    %cst_24 = arith.constant dense<0xFF800000> : vector<64xf32>
    %68 = vector.multi_reduction <maximumf>, %67, %cst_24 [0] : vector<64x64xf32> to vector<64xf32>
    %69 = vector.shape_cast %68 : vector<64xf32> to vector<1x64xf32>
    %70 = vector.extract_strided_slice %5 {offsets = [0, 3], sizes = [64, 1], strides = [1, 1]} : vector<64x4xf32> to vector<64x1xf32>
    %71 = vector.broadcast %70 : vector<64x1xf32> to vector<64x64xf32>
    %72 = arith.mulf %3, %71 : vector<64x64xf32>
    %cst_25 = arith.constant dense<0x7F800000> : vector<64xf32>
    %73 = vector.multi_reduction <minimumf>, %72, %cst_25 [1] : vector<64x64xf32> to vector<64xf32>
    %74 = vector.shape_cast %73 : vector<64xf32> to vector<64x1xf32>
    %cst_26 = arith.constant dense<0xFF800000> : vector<64xf32>
    %75 = vector.multi_reduction <maximumf>, %72, %cst_26 [1] : vector<64x64xf32> to vector<64xf32>
    %76 = vector.shape_cast %75 : vector<64xf32> to vector<64x1xf32>
    %77 = vector.broadcast %76 : vector<64x1xf32> to vector<64x64xf32>
    %78 = arith.cmpf oge, %72, %77 : vector<64x64xf32>
    %79 = arith.extui %78 : vector<64x64xi1> to vector<64x64xi32>
    %80 = arith.sitofp %79 : vector<64x64xi32> to vector<64x64xf32>
    %81 = arith.truncf %80 : vector<64x64xf32> to vector<64x64xbf16>
    %cst_27 = arith.constant dense<0.000000e+00> : vector<64x1xf32>
    %82 = tpu.matmul %81, %6, %cst_27 {dimension_numbers = #tpu.dot_dimension_numbers<[1], [0], [0], [1], [0, 0, 1, 1], [], []>} : vector<64x64xbf16>, vector<64x1xbf16>, vector<64x1xf32> -> vector<64x1xf32>
    %cst_28 = arith.constant 0xFF800000 : f32
    %83 = vector.broadcast %cst_28 : f32 to vector<64x64xf32>
    %84 = arith.select %78, %83, %72 : vector<64x64xi1>, vector<64x64xf32>
    %cst_29 = arith.constant dense<0xFF800000> : vector<64xf32>
    %85 = vector.multi_reduction <maximumf>, %84, %cst_29 [1] : vector<64x64xf32> to vector<64xf32>
    %86 = vector.shape_cast %85 : vector<64xf32> to vector<64x1xf32>
    %cst_30 = arith.constant 4.000000e+00 : f32
    %87 = vector.broadcast %cst_30 : f32 to vector<64x1xf32>
    %88 = arith.cmpf oge, %82, %87 : vector<64x1xf32>
    %89 = arith.select %88, %76, %86 : vector<64x1xi1>, vector<64x1xf32>
    %90 = vector.broadcast %89 : vector<64x1xf32> to vector<64x64xf32>
    %91 = arith.cmpf oge, %72, %90 : vector<64x64xf32>
    %92 = arith.extui %91 : vector<64x64xi1> to vector<64x64xi32>
    %93 = arith.sitofp %92 : vector<64x64xi32> to vector<64x64xf32>
    %94 = arith.truncf %93 : vector<64x64xf32> to vector<64x64xbf16>
    %cst_31 = arith.constant dense<0.000000e+00> : vector<64x1xf32>
    %95 = tpu.matmul %94, %6, %cst_31 {dimension_numbers = #tpu.dot_dimension_numbers<[1], [0], [0], [1], [0, 0, 1, 1], [], []>} : vector<64x64xbf16>, vector<64x1xbf16>, vector<64x1xf32> -> vector<64x1xf32>
    %cst_32 = arith.constant 0xFF800000 : f32
    %96 = vector.broadcast %cst_32 : f32 to vector<64x64xf32>
    %97 = arith.select %91, %96, %72 : vector<64x64xi1>, vector<64x64xf32>
    %cst_33 = arith.constant dense<0xFF800000> : vector<64xf32>
    %98 = vector.multi_reduction <maximumf>, %97, %cst_33 [1] : vector<64x64xf32> to vector<64xf32>
    %99 = vector.shape_cast %98 : vector<64xf32> to vector<64x1xf32>
    %cst_34 = arith.constant 4.000000e+00 : f32
    %100 = vector.broadcast %cst_34 : f32 to vector<64x1xf32>
    %101 = arith.cmpf oge, %95, %100 : vector<64x1xf32>
    %102 = arith.select %101, %89, %99 : vector<64x1xi1>, vector<64x1xf32>
    %103 = vector.broadcast %102 : vector<64x1xf32> to vector<64x64xf32>
    %104 = arith.cmpf oge, %72, %103 : vector<64x64xf32>
    %105 = arith.extui %104 : vector<64x64xi1> to vector<64x64xi32>
    %106 = arith.sitofp %105 : vector<64x64xi32> to vector<64x64xf32>
    %107 = arith.truncf %106 : vector<64x64xf32> to vector<64x64xbf16>
    %cst_35 = arith.constant dense<0.000000e+00> : vector<64x1xf32>
    %108 = tpu.matmul %107, %6, %cst_35 {dimension_numbers = #tpu.dot_dimension_numbers<[1], [0], [0], [1], [0, 0, 1, 1], [], []>} : vector<64x64xbf16>, vector<64x1xbf16>, vector<64x1xf32> -> vector<64x1xf32>
    %cst_36 = arith.constant 0xFF800000 : f32
    %109 = vector.broadcast %cst_36 : f32 to vector<64x64xf32>
    %110 = arith.select %104, %109, %72 : vector<64x64xi1>, vector<64x64xf32>
    %cst_37 = arith.constant dense<0xFF800000> : vector<64xf32>
    %111 = vector.multi_reduction <maximumf>, %110, %cst_37 [1] : vector<64x64xf32> to vector<64xf32>
    %112 = vector.shape_cast %111 : vector<64xf32> to vector<64x1xf32>
    %cst_38 = arith.constant 4.000000e+00 : f32
    %113 = vector.broadcast %cst_38 : f32 to vector<64x1xf32>
    %114 = arith.cmpf oge, %108, %113 : vector<64x1xf32>
    %115 = arith.select %114, %102, %112 : vector<64x1xi1>, vector<64x1xf32>
    %116 = vector.broadcast %115 : vector<64x1xf32> to vector<64x64xf32>
    %117 = arith.cmpf olt, %72, %116 : vector<64x64xf32>
    %118 = vector.shape_cast %74 : vector<64x1xf32> to vector<64x1xf32>
    %119 = vector.broadcast %118 : vector<64x1xf32> to vector<64x64xf32>
    %120 = arith.select %117, %119, %72 : vector<64x64xi1>, vector<64x64xf32>
    %cst_39 = arith.constant dense<0xFF800000> : vector<64xf32>
    %121 = vector.multi_reduction <maximumf>, %120, %cst_39 [0] : vector<64x64xf32> to vector<64xf32>
    %122 = vector.shape_cast %121 : vector<64xf32> to vector<1x64xf32>
    %123 = tpu.concatenate %11, %16, %69, %122 in 0 : vector<1x64xf32>, vector<1x64xf32>, vector<1x64xf32>, vector<1x64xf32> -> vector<4x64xf32>
    %c0_i32 = arith.constant 0 : i32
    %124 = arith.cmpi eq, %arg1, %c0_i32 : i32
    %125 = arith.extui %124 : i1 to i32
    %c0_i32_40 = arith.constant 0 : i32
    %126 = arith.cmpi ne, %125, %c0_i32_40 : i32
    scf.if %126 {
      %c0_43 = arith.constant 0 : index
      %c0_44 = arith.constant 0 : index
      %c0_45 = arith.constant 0 : index
      %130 = vector.load %arg5[%c0_43, %c0_44, %c0_45] : memref<1x4x64xf32, #tpu.memory_space<vmem>>, vector<1x4x64xf32>
      %131 = vector.shape_cast %130 : vector<1x4x64xf32> to vector<4x64xf32>
      %132 = vector.shape_cast %123 : vector<4x64xf32> to vector<1x4x64xf32>
      tpu.vector_store %arg5[%c0_43, %c0_44, %c0_45], %132 {strides = array<i32>} : memref<1x4x64xf32, #tpu.memory_space<vmem>>, vector<1x4x64xf32>,
    } else {
    }
    %c0_i32_41 = arith.constant 0 : i32
    %127 = arith.cmpi sgt, %arg1, %c0_i32_41 : i32
    %128 = arith.extui %127 : i1 to i32
    %c0_i32_42 = arith.constant 0 : i32
    %129 = arith.cmpi ne, %128, %c0_i32_42 : i32
    scf.if %129 {
      %c0_43 = arith.constant 0 : index
      %c0_44 = arith.constant 0 : index
      %c0_45 = arith.constant 0 : index
      %130 = vector.load %arg5[%c0_43, %c0_44, %c0_45] : memref<1x4x64xf32, #tpu.memory_space<vmem>>, vector<1x4x64xf32>
      %131 = vector.shape_cast %130 : vector<1x4x64xf32> to vector<4x64xf32>
      %132 = arith.maximumf %131, %123 : vector<4x64xf32>
      %c0_46 = arith.constant 0 : index
      %c0_47 = arith.constant 0 : index
      %c0_48 = arith.constant 0 : index
      %133 = vector.load %arg5[%c0_46, %c0_47, %c0_48] : memref<1x4x64xf32, #tpu.memory_space<vmem>>, vector<1x4x64xf32>
      %134 = vector.shape_cast %133 : vector<1x4x64xf32> to vector<4x64xf32>
      %135 = vector.shape_cast %132 : vector<4x64xf32> to vector<1x4x64xf32>
      tpu.vector_store %arg5[%c0_46, %c0_47, %c0_48], %135 {strides = array<i32>} : memref<1x4x64xf32, #tpu.memory_space<vmem>>, vector<1x4x64xf32>,
    } else {
    }
    return
  }
  func.func @transform_0(%arg0: i32, %arg1: i32) -> (i32, i32, i32) {
    %c0_i32 = arith.constant 0 : i32
    %c0_i32_0 = arith.constant 0 : i32
    return %arg0, %arg1, %c0_i32 : i32, i32, i32
  }
  func.func @transform_1(%arg0: i32, %arg1: i32) -> (i32, i32, i32) {
    %c0_i32 = arith.constant 0 : i32
    %c0_i32_0 = arith.constant 0 : i32
    return %arg0, %arg1, %c0_i32 : i32, i32, i32
  }
  func.func @transform_2(%arg0: i32, %arg1: i32) -> (i32, i32, i32) {
    %c0_i32 = arith.constant 0 : i32
    %c0_i32_0 = arith.constant 0 : i32
    return %arg0, %arg1, %c0_i32 : i32, i32, i32
  }
  func.func @transform_3(%arg0: i32, %arg1: i32) -> (i32, i32, i32) {
    %c0_i32 = arith.constant 0 : i32
    %c0_i32_0 = arith.constant 0 : i32
    %c0_i32_1 = arith.constant 0 : i32
    return %arg0, %c0_i32, %c0_i32_0 : i32, i32, i32
  }
}

</mosaic_0001>

<llo_original>
// kernel: tpu_custom_call.1
$region0: #{tpu_custom_call.1}
  #allocation0 [shape = 'u32[]', space=smem, size = 0x4, offset = 0x4, fixed_abs, tag = 'smem constant byte address 0x4 - core index']
  #allocation1 [shape = 'u32[144,128]{1,0:T(1,128)}', space=vmem, size = 0x12000, scoped, tag = 'internal scratch']
  %s0 = inlined_call_operand.vmem [shape: f32[2,64,64], index: 0, kind: input, shape index: {}]
  %s1 = inlined_call_operand.hbm [shape: f32[2,64,64], index: 1, kind: input, shape index: {}]
  %s2 = inlined_call_operand.vmem [shape: f32[2,64,4], index: 2, kind: input, shape index: {}]
  %s3 = inlined_call_operand.hbm [shape: f32[2,4,64], index: 3, kind: output, shape index: {}]
  %s4 = sld [smem:[#allocation0]]
  $region57: #{tpu_custom_call.1} parent=0
    _
  %s6 = ssub.s32 1, %s4
  %s7 = scalar_select 0, %s6, %s4
  $region1: #{tpu_custom_call.1} parent=0
    #allocation2 [shape = 'u8[65536]{0}', space=vmem, size = 0x10000, scoped, tag = 'input window, operand 1']
    #allocation3 [shape = 's32[2]{0}', space=sflag, size = 0x8, scoped, tag = 'scoped memory for tpu_custom_call.1']
    #allocation4 [shape = 's32[2]{0}', space=sflag, size = 0x8, scoped, tag = 'scoped memory for tpu_custom_call.1']
    #allocation5 [shape = 'u8[4096]{0}', space=vmem, size = 0x1000, scoped, tag = 'output window, operand 0']
    %8 = vsyncpa [#allocation3], 0
    %s9 = scalar_lea.sflag [#allocation3], 1
    %10 = vsyncpa %s9, 0
    %11 = vsyncpa [#allocation4], 0
    %s12 = scalar_lea.sflag [#allocation4], 1
    %13 = vsyncpa %s12, 0
    loop: start=0, step=1, limit=4
    $region2: #{tpu_custom_call.1} parent=1 // loop_pre_header
      _
    $region3: #{tpu_custom_call.1} parent=1 // loop_header
      %s15 = sphi 0, %s19
      %p16 = scmp.ge.s32.totalorder %s15, 4
      %s22 = sphi 0, %s34
      %s23 = sphi 0, %s30
      %s24 = sphi 0, %s22
      %s25 = sphi 0, %s23
      %s26 = sphi 0, %s24
      %s27 = sphi 0, %s25
      %s39 = sphi 0, %s41
      %s42 = sphi 0, %s39
      %s43 = sphi 0, %s42
      %s59 = sphi 0, %s43
      %s67 = sphi 0, %s69
      %s70 = sphi 0, %s67
      %s71 = sphi 0, %s70
      %s87 = sphi 0, %s71
      %s95 = sphi 0, %s97
      %s98 = sphi 0, %s95
      %s99 = sphi 0, %s98
      %s115 = sphi 0, %s99
      %s121 = sphi 0, %s123
      %s124 = sphi 0, %s121
      %s125 = sphi 0, %s124
      %s141 = sphi 0, %s125
    $region4: #{tpu_custom_call.1} parent=1 // loop_header_branch
      %18 = sbr.rel (%p16) target = $region8
    $region5: #{tpu_custom_call.1} parent=1 // loop_body
      %s20 = ssub.s32 %s15, 1
      %s21 = ssub.s32 %s15, 2
      %s28 = sadd.s32 1, %s23
      %p29 = scmp.ge.s32.totalorder %s28, 1
      %s30 = scalar_select %p29, 0, %s28
      %s31 = sadd.s32 1, %s22
      %s32 = scalar_select %p29, %s31, %s22
      %p33 = scmp.ge.s32.totalorder %s32, 2
      %s34 = scalar_select %p33, 0, %s32
      %s35 = ssub.s32 %s22, %s34
      %s36 = ssub.s32 %s23, %s30
      %s37 = sor.u32 %s35, %s36
      %p38 = scmp.eq.s32.totalorder %s37, 0
      %s40 = sadd.s32 %s39, 1
      %s41 = scalar_select %p38, %s39, %s40
      %p44 = pneg %p38
      %p45 = scmp.eq.s32.totalorder %s15, 1
      %p46 = por %p44, %p45
      %p47 = scmp.ne.s32.totalorder %s39, %s42
      %p48 = scmp.eq.s32.totalorder %s15, 0
      %p49 = por %p47, %p48
      %p50 = scmp.ne.s32.totalorder %s39, %s42
      %p51 = scmp.eq.s32.totalorder %s20, 1
      %p52 = por %p50, %p51
      %p53 = scmp.ne.s32.totalorder %s42, %s43
      %p54 = scmp.eq.s32.totalorder %s20, 0
      %p55 = por %p53, %p54
      %p56 = scmp.ne.s32.totalorder %s42, %s43
      %p57 = scmp.eq.s32.totalorder %s21, 1
      %p58 = por %p56, %p57
      %p60 = scmp.ne.s32.totalorder %s43, %s59
      %p61 = scmp.eq.s32.totalorder %s21, 0
      %p62 = por %p60, %p61
      %s63 = ssub.s32 %s22, %s34
      %s64 = ssub.s32 %s23, %s30
      %s65 = sor.u32 %s63, %s64
      %p66 = scmp.eq.s32.totalorder %s65, 0
      %s68 = sadd.s32 %s67, 1
      %s69 = scalar_select %p66, %s67, %s68
      %p72 = pneg %p66
      %p73 = scmp.eq.s32.totalorder %s15, 1
      %p74 = por %p72, %p73
      %p75 = scmp.ne.s32.totalorder %s67, %s70
      %p76 = scmp.eq.s32.totalorder %s15, 0
      %p77 = por %p75, %p76
      %p78 = scmp.ne.s32.totalorder %s67, %s70
      %p79 = scmp.eq.s32.totalorder %s20, 1
      %p80 = por %p78, %p79
      %p81 = scmp.ne.s32.totalorder %s70, %s71
      %p82 = scmp.eq.s32.totalorder %s20, 0
      %p83 = por %p81, %p82
      %p84 = scmp.ne.s32.totalorder %s70, %s71
      %p85 = scmp.eq.s32.totalorder %s21, 1
      %p86 = por %p84, %p85
      %p88 = scmp.ne.s32.totalorder %s71, %s87
      %p89 = scmp.eq.s32.totalorder %s21, 0
      %p90 = por %p88, %p89
      %s91 = ssub.s32 %s22, %s34
      %s92 = ssub.s32 %s23, %s30
      %s93 = sor.u32 %s91, %s92
      %p94 = scmp.eq.s32.totalorder %s93, 0
      %s96 = sadd.s32 %s95, 1
      %s97 = scalar_select %p94, %s95, %s96
      %p100 = pneg %p94
      %p101 = scmp.eq.s32.totalorder %s15, 1
      %p102 = por %p100, %p101
      %p103 = scmp.ne.s32.totalorder %s95, %s98
      %p104 = scmp.eq.s32.totalorder %s15, 0
      %p105 = por %p103, %p104
      %p106 = scmp.ne.s32.totalorder %s95, %s98
      %p107 = scmp.eq.s32.totalorder %s20, 1
      %p108 = por %p106, %p107
      %p109 = scmp.ne.s32.totalorder %s98, %s99
      %p110 = scmp.eq.s32.totalorder %s20, 0
      %p111 = por %p109, %p110
      %p112 = scmp.ne.s32.totalorder %s98, %s99
      %p113 = scmp.eq.s32.totalorder %s21, 1
      %p114 = por %p112, %p113
      %p116 = scmp.ne.s32.totalorder %s99, %s115
      %p117 = scmp.eq.s32.totalorder %s21, 0
      %p118 = por %p116, %p117
      %s119 = ssub.s32 %s22, %s34
      %p120 = scmp.eq.s32.totalorder %s119, 0
      %s122 = sadd.s32 %s121, 1
      %s123 = scalar_select %p120, %s121, %s122
      %p126 = pneg %p120
      %p127 = scmp.eq.s32.totalorder %s15, 1
      %p128 = por %p126, %p127
      %p129 = scmp.ne.s32.totalorder %s121, %s124
      %p130 = scmp.eq.s32.totalorder %s15, 0
      %p131 = por %p129, %p130
      %p132 = scmp.ne.s32.totalorder %s121, %s124
      %p133 = scmp.eq.s32.totalorder %s20, 1
      %p134 = por %p132, %p133
      %p135 = scmp.ne.s32.totalorder %s124, %s125
      %p136 = scmp.eq.s32.totalorder %s20, 0
      %p137 = por %p135, %p136
      %p138 = scmp.ne.s32.totalorder %s124, %s125
      %p139 = scmp.eq.s32.totalorder %s21, 1
      %p140 = por %p138, %p139
      %p142 = scmp.ne.s32.totalorder %s125, %s141
      %p143 = scmp.eq.s32.totalorder %s21, 0
      %p144 = por %p142, %p143
      %p145 = scmp.le.s32.totalorder 1, %s15
      %p146 = scmp.lt.s32.totalorder %s15, 3
      %p147 = pnand %p145, %p146
      %p148 = pneg %p147
      // Predicated region
      $region9: #{tpu_custom_call.1} parent=5 // pred_check
        _
      $region10: #{tpu_custom_call.1} parent=5 // pred_check_branch
        %150 = sbr.rel (%p147) target = $region12
      $region11: #{tpu_custom_call.1} parent=5 // pred_region
        %s151 = ssub.s32 %s15, 1
      $region12: #{tpu_custom_call.1} parent=5 // pred_fallthru
        _
      %p152 = scmp.lt.s32.totalorder %s15, 2
      // Predicated region
      $region13: #{tpu_custom_call.1} parent=5 // pred_check
        %p153 = pneg %p152
      $region14: #{tpu_custom_call.1} parent=5 // pred_check_branch
        %155 = sbr.rel (%p153) target = $region16
      $region15: #{tpu_custom_call.1} parent=5 // pred_region
        // Predicated region
        $region17: #{tpu_custom_call.1} parent=15 // pred_check
          %p156 = pneg %p49
        $region18: #{tpu_custom_call.1} parent=15 // pred_check_branch
          %158 = sbr.rel (%p156) target = $region20
        $region19: #{tpu_custom_call.1} parent=15 // pred_region
          %s159 = smul.u32 8, %s23
          %p160 = scmp.lt.s32.totalorder %s22, 1
          %s161 = scalar_select %p160, %s22, 1
          %p162 = scmp.lt.s32.totalorder %s159, 7
          %s163 = scalar_select %p162, %s159, 7
          %s164 = smul.addr %s161, 8
          %s165 = sadd.s32 %s163, %s164
          %s166 = smul.addr %s165, 8
          %s167 = scalar_lea.vmem %s0, %s166
          %s168 = smul.u32 8, %s23
        $region20: #{tpu_custom_call.1} parent=15 // pred_fallthru
          _
        // Predicated region
        $region21: #{tpu_custom_call.1} parent=15 // pred_check
          %p169 = pneg %p77
        $region22: #{tpu_custom_call.1} parent=15 // pred_check_branch
          %171 = sbr.rel (%p169) target = $region24
        $region23: #{tpu_custom_call.1} parent=15 // pred_region
          %s172 = sand.u32 %s67, 1
          %s173 = scalar_lea.sflag [#allocation3], %s172
          %s174 = sand.u32 %s67, 1
          %s175 = smul.addr %s174, 64
          %s176 = scalar_lea.vmem [#allocation2], %s175
          %s177 = smul.u32 8, %s23
          %s179 = ssub.s32 1024, 1024
          %180 = vsyncadd %s173, %s179
          %s181 = smul.addr %s22, 8
          %s182 = sadd.s32 %s177, %s181
          %s183 = smul.addr %s182, 128
          %s184 = scalar_lea.hbm %s1, %s183
          %s185 = sshll.u32 %s176, 4
          %s186 = int_to_ptr.vmem [resolvable:$true] %s185
          %191 = dma.hbm_to_vmem [thread:$0]  %s184, 1024, %s186, %s173, 128, 128, 8
        $region24: #{tpu_custom_call.1} parent=15 // pred_fallthru
          _
        // Predicated region
        $region25: #{tpu_custom_call.1} parent=15 // pred_check
          %p192 = pneg %p105
        $region26: #{tpu_custom_call.1} parent=15 // pred_check_branch
          %194 = sbr.rel (%p192) target = $region28
        $region27: #{tpu_custom_call.1} parent=15 // pred_region
          %s195 = smul.u32 8, %s23
          %p196 = scmp.lt.s32.totalorder %s22, 1
          %s197 = scalar_select %p196, %s22, 1
          %p198 = scmp.lt.s32.totalorder %s195, 7
          %s199 = scalar_select %p198, %s195, 7
          %s200 = smul.addr %s197, 8
          %s201 = sadd.s32 %s199, %s200
          %s202 = smul.addr %s201, 8
          %s203 = scalar_lea.vmem %s2, %s202
          %s204 = smul.u32 8, %s23
        $region28: #{tpu_custom_call.1} parent=15 // pred_fallthru
          _
      $region16: #{tpu_custom_call.1} parent=5 // pred_fallthru
        _
      %p205 = scmp.le.s32.totalorder 1, %s15
      %p206 = scmp.lt.s32.totalorder %s15, 3
      %p207 = pnand %p205, %p206
      %p208 = pneg %p207
      // Predicated region
      $region29: #{tpu_custom_call.1} parent=5 // pred_check
        _
      $region30: #{tpu_custom_call.1} parent=5 // pred_check_branch
        %210 = sbr.rel (%p207) target = $region32
      $region31: #{tpu_custom_call.1} parent=5 // pred_region
        %s211 = ssub.s32 %s15, 1
        %s212 = sand.u32 %s70, 1
        %s213 = scalar_lea.sflag [#allocation3], %s212
        %s214 = sand.u32 %s70, 1
        %s215 = smul.addr %s214, 64
        %s216 = scalar_lea.vmem [#allocation2], %s215
        // Predicated region
        $region33: #{tpu_custom_call.1} parent=31 // pred_check
          %p217 = pneg %p83
        $region34: #{tpu_custom_call.1} parent=31 // pred_check_branch
          %219 = sbr.rel (%p217) target = $region36
        $region35: #{tpu_custom_call.1} parent=31 // pred_region
          %220 = dma.done %s213, 1024
        $region36: #{tpu_custom_call.1} parent=31 // pred_fallthru
          _
        %s221 = smul.u32 8, %s25
        %p222 = scmp.lt.s32.totalorder %s24, 1
        %s223 = scalar_select %p222, %s24, 1
        %p224 = scmp.lt.s32.totalorder %s221, 7
        %s225 = scalar_select %p224, %s221, 7
        %s226 = smul.addr %s223, 8
        %s227 = sadd.s32 %s225, %s226
        %s228 = smul.addr %s227, 8
        %s229 = scalar_lea.vmem %s0, %s228
        %p230 = pneg %p55
        %p231 = pneg %p52
        %s232 = sand.u32 %s70, 1
        %s233 = scalar_lea.sflag [#allocation3], %s232
        %s234 = sand.u32 %s70, 1
        %s235 = smul.addr %s234, 64
        %s236 = scalar_lea.vmem [#allocation2], %s235
        %p237 = pneg %p83
        %p238 = pneg %p80
        %s239 = smul.u32 8, %s25
        %p240 = scmp.lt.s32.totalorder %s24, 1
        %s241 = scalar_select %p240, %s24, 1
        %p242 = scmp.lt.s32.totalorder %s239, 7
        %s243 = scalar_select %p242, %s239, 7
        %s244 = smul.addr %s241, 8
        %s245 = sadd.s32 %s243, %s244
        %s246 = smul.addr %s245, 8
        %s247 = scalar_lea.vmem %s2, %s246
        %p248 = pneg %p111
        %p249 = pneg %p108
        %p250 = pneg %p137
        %p251 = pneg %p134
        %s252 = sand.u32 %s124, 1
        %s253 = scalar_lea.sflag [#allocation4], %s252
        %s254 = sand.u32 %s124, 1
        %s255 = smul.addr %s254, 4
        %s256 = scalar_lea.vmem [#allocation5], %s255
        %s257 = smul.u32 8, %s25
        %p258 = scmp.lt.s32.totalorder %s24, 1
        %s259 = scalar_select %p258, %s24, 1
        %p260 = scmp.lt.s32.totalorder %s257, 7
        %s261 = scalar_select %p260, %s257, 7
        %s262 = smul.addr %s259, 8
        %s263 = sadd.s32 %s261, %s262
        %s264 = smul.addr %s263, 8
        %s265 = scalar_lea.vmem %s0, %s264
        %s266 = smul.u32 8, %s25
        %s267 = smul.u32 8, %s25
        %s268 = smul.u32 8, %s25
        %p269 = scmp.lt.s32.totalorder %s24, 1
        %s270 = scalar_select %p269, %s24, 1
        %p271 = scmp.lt.s32.totalorder %s268, 7
        %s272 = scalar_select %p271, %s268, 7
        %s273 = smul.addr %s270, 8
        %s274 = sadd.s32 %s272, %s273
        %s275 = smul.addr %s274, 8
        %s276 = scalar_lea.vmem %s2, %s275
        %s277 = smul.u32 8, %s25
        %v280 = vld [vmem:[%s265] sm:$0xff]
        %v281 = vld [vmem:[%s265 + $0x8] sm:$0xff]
        %v282 = vld [vmem:[%s265 + $0x10] sm:$0xff]
        %v283 = vld [vmem:[%s265 + $0x18] sm:$0xff]
        %v284 = vld [vmem:[%s265 + $0x20] sm:$0xff]
        %v285 = vld [vmem:[%s265 + $0x28] sm:$0xff]
        %v286 = vld [vmem:[%s265 + $0x30] sm:$0xff]
        %v287 = vld [vmem:[%s265 + $0x38] sm:$0xff]
        %v288 = vld [vmem:[%s216] sm:$0xff]
        %v289 = vld [vmem:[%s216 + $0x8] sm:$0xff]
        %v290 = vld [vmem:[%s216 + $0x10] sm:$0xff]
        %v291 = vld [vmem:[%s216 + $0x18] sm:$0xff]
        %v292 = vld [vmem:[%s216 + $0x20] sm:$0xff]
        %v293 = vld [vmem:[%s216 + $0x28] sm:$0xff]
        %v294 = vld [vmem:[%s216 + $0x30] sm:$0xff]
        %v295 = vld [vmem:[%s216 + $0x38] sm:$0xff]
        %v296 = vld [vmem:[%s276] sm:$0xff]
        %v297 = vld [vmem:[%s276 + $0x8] sm:$0xff]
        %v298 = vld [vmem:[%s276 + $0x10] sm:$0xff]
        %v299 = vld [vmem:[%s276 + $0x18] sm:$0xff]
        %v300 = vld [vmem:[%s276 + $0x20] sm:$0xff]
        %v301 = vld [vmem:[%s276 + $0x28] sm:$0xff]
        %v302 = vld [vmem:[%s276 + $0x30] sm:$0xff]
        %v303 = vld [vmem:[%s276 + $0x38] sm:$0xff]
        %305 = vset.pattern.permute.xlu0 0
        %306 = vperm.xlu0 %305, %v296
        %v307 = vpop.permute.xlu0 %306
        %310 = vset.pattern.permute.xlu0 0
        %311 = vperm.xlu0 %310, %v297
        %v312 = vpop.permute.xlu0 %311
        %315 = vset.pattern.permute.xlu0 0
        %316 = vperm.xlu0 %315, %v298
        %v317 = vpop.permute.xlu0 %316
        %320 = vset.pattern.permute.xlu0 0
        %321 = vperm.xlu0 %320, %v299
        %v322 = vpop.permute.xlu0 %321
        %325 = vset.pattern.permute.xlu0 0
        %326 = vperm.xlu0 %325, %v300
        %v327 = vpop.permute.xlu0 %326
        %330 = vset.pattern.permute.xlu0 0
        %331 = vperm.xlu0 %330, %v301
        %v332 = vpop.permute.xlu0 %331
        %335 = vset.pattern.permute.xlu0 0
        %336 = vperm.xlu0 %335, %v302
        %v337 = vpop.permute.xlu0 %336
        %340 = vset.pattern.permute.xlu0 0
        %341 = vperm.xlu0 %340, %v303
        %v342 = vpop.permute.xlu0 %341
        %v344 = vmul.f32 %v280, %v307
        %v345 = vmul.f32 %v281, %v312
        %v346 = vmul.f32 %v282, %v317
        %v347 = vmul.f32 %v283, %v322
        %v348 = vmul.f32 %v284, %v327
        %v349 = vmul.f32 %v285, %v332
        %v350 = vmul.f32 %v286, %v337
        %v351 = vmul.f32 %v287, %v342
        %vm352 = vcmask 523264
        %v353 = vsel %vm352, %v344, -inf
        %v354 = vsel %vm352, %v345, -inf
        %v355 = vsel %vm352, %v346, -inf
        %v356 = vsel %vm352, %v347, -inf
        %v357 = vsel %vm352, %v348, -inf
        %v358 = vmax.f32 %v353, %v357
        %v359 = vsel %vm352, %v349, -inf
        %v360 = vmax.f32 %v354, %v359
        %v361 = vsel %vm352, %v350, -inf
        %v362 = vmax.f32 %v355, %v361
        %v363 = vsel %vm352, %v351, -inf
        %v364 = vmax.f32 %v356, %v363
        %v365 = vmax.f32 %v358, %v360
        %v366 = vmax.f32 %v362, %v364
        %v367 = vmax.f32 %v365, %v366
        %v368 = vrot.slane %v367, 4
        %v369 = vmax.f32 %v367, %v368
        %v370 = vrot.slane %v369, 2
        %v371 = vmax.f32 %v369, %v370
        %v372 = vrot.slane %v371, 1
        %v373 = vmax.f32 %v371, %v372
        %374 = vset.pattern.permute.xlu0 1
        %375 = vperm.xlu0 %374, %v296
        %v376 = vpop.permute.xlu0 %375
        %378 = vset.pattern.permute.xlu0 1
        %379 = vperm.xlu0 %378, %v297
        %v380 = vpop.permute.xlu0 %379
        %382 = vset.pattern.permute.xlu0 1
        %383 = vperm.xlu0 %382, %v298
        %v384 = vpop.permute.xlu0 %383
        %386 = vset.pattern.permute.xlu0 1
        %387 = vperm.xlu0 %386, %v299
        %v388 = vpop.permute.xlu0 %387
        %390 = vset.pattern.permute.xlu0 1
        %391 = vperm.xlu0 %390, %v300
        %v392 = vpop.permute.xlu0 %391
        %394 = vset.pattern.permute.xlu0 1
        %395 = vperm.xlu0 %394, %v301
        %v396 = vpop.permute.xlu0 %395
        %398 = vset.pattern.permute.xlu0 1
        %399 = vperm.xlu0 %398, %v302
        %v400 = vpop.permute.xlu0 %399
        %402 = vset.pattern.permute.xlu0 1
        %403 = vperm.xlu0 %402, %v303
        %v404 = vpop.permute.xlu0 %403
        %v406 = vmul.f32 %v280, %v376
        %v407 = vmul.f32 %v281, %v380
        %v408 = vmul.f32 %v282, %v384
        %v409 = vmul.f32 %v283, %v388
        %v410 = vmul.f32 %v284, %v392
        %v411 = vmul.f32 %v285, %v396
        %v412 = vmul.f32 %v286, %v400
        %v413 = vmul.f32 %v287, %v404
        %v414 = vsel %vm352, %v406, -inf
        %v415 = vsel %vm352, %v407, -inf
        %v416 = vsel %vm352, %v408, -inf
        %v417 = vsel %vm352, %v409, -inf
        %v418 = vsel %vm352, %v410, -inf
        %v419 = vmax.f32 %v414, %v418
        %v420 = vsel %vm352, %v411, -inf
        %v421 = vmax.f32 %v415, %v420
        %v422 = vsel %vm352, %v412, -inf
        %v423 = vmax.f32 %v416, %v422
        %v424 = vsel %vm352, %v413, -inf
        %v425 = vmax.f32 %v417, %v424
        %v426 = vmax.f32 %v419, %v421
        %v427 = vmax.f32 %v423, %v425
        %v428 = vmax.f32 %v426, %v427
        %v429 = vrot.slane %v428, 4
        %v430 = vmax.f32 %v428, %v429
        %v431 = vrot.slane %v430, 2
        %v432 = vmax.f32 %v430, %v431
        %v433 = vrot.slane %v432, 1
        %v434 = vmax.f32 %v432, %v433
        %435 = vset.pattern.permute.xlu0 2
        %436 = vperm.xlu0 %435, %v296
        %v437 = vpop.permute.xlu0 %436
        %439 = vset.pattern.permute.xlu0 2
        %440 = vperm.xlu0 %439, %v297
        %v441 = vpop.permute.xlu0 %440
        %443 = vset.pattern.permute.xlu0 2
        %444 = vperm.xlu0 %443, %v298
        %v445 = vpop.permute.xlu0 %444
        %447 = vset.pattern.permute.xlu0 2
        %448 = vperm.xlu0 %447, %v299
        %v449 = vpop.permute.xlu0 %448
        %451 = vset.pattern.permute.xlu0 2
        %452 = vperm.xlu0 %451, %v300
        %v453 = vpop.permute.xlu0 %452
        %455 = vset.pattern.permute.xlu0 2
        %456 = vperm.xlu0 %455, %v301
        %v457 = vpop.permute.xlu0 %456
        %459 = vset.pattern.permute.xlu0 2
        %460 = vperm.xlu0 %459, %v302
        %v461 = vpop.permute.xlu0 %460
        %463 = vset.pattern.permute.xlu0 2
        %464 = vperm.xlu0 %463, %v303
        %v465 = vpop.permute.xlu0 %464
        %v467 = vmul.f32 %v288, %v437
        %v468 = vmul.f32 %v289, %v441
        %v469 = vmul.f32 %v290, %v445
        %v470 = vmul.f32 %v291, %v449
        %v471 = vmul.f32 %v292, %v453
        %v472 = vmul.f32 %v293, %v457
        %v473 = vmul.f32 %v294, %v461
        %v474 = vmul.f32 %v295, %v465
        %v475 = vsel %vm352, %v467, inf
        %476 = vmin.xlane.f32.xlu0 %v475
        %v477 = vpop.xlane.xlu0 %476
        %v478 = vsel %vm352, %v468, inf
        %479 = vmin.xlane.f32.xlu0 %v478
        %v480 = vpop.xlane.xlu0 %479
        %v481 = vsel %vm352, %v469, inf
        %482 = vmin.xlane.f32.xlu0 %v481
        %v483 = vpop.xlane.xlu0 %482
        %v484 = vsel %vm352, %v470, inf
        %485 = vmin.xlane.f32.xlu0 %v484
        %v486 = vpop.xlane.xlu0 %485
        %v487 = vsel %vm352, %v471, inf
        %488 = vmin.xlane.f32.xlu0 %v487
        %v489 = vpop.xlane.xlu0 %488
        %v490 = vsel %vm352, %v472, inf
        %491 = vmin.xlane.f32.xlu0 %v490
        %v492 = vpop.xlane.xlu0 %491
        %v493 = vsel %vm352, %v473, inf
        %494 = vmin.xlane.f32.xlu0 %v493
        %v495 = vpop.xlane.xlu0 %494
        %v496 = vsel %vm352, %v474, inf
        %497 = vmin.xlane.f32.xlu0 %v496
        %v498 = vpop.xlane.xlu0 %497
        %v499 = vsel %vm352, %v467, -inf
        %500 = vmax.xlane.f32.xlu0 %v499
        %v501 = vpop.xlane.xlu0 %500
        %v502 = vsel %vm352, %v468, -inf
        %503 = vmax.xlane.f32.xlu0 %v502
        %v504 = vpop.xlane.xlu0 %503
        %v505 = vsel %vm352, %v469, -inf
        %506 = vmax.xlane.f32.xlu0 %v505
        %v507 = vpop.xlane.xlu0 %506
        %v508 = vsel %vm352, %v470, -inf
        %509 = vmax.xlane.f32.xlu0 %v508
        %v510 = vpop.xlane.xlu0 %509
        %v511 = vsel %vm352, %v471, -inf
        %512 = vmax.xlane.f32.xlu0 %v511
        %v513 = vpop.xlane.xlu0 %512
        %v514 = vsel %vm352, %v472, -inf
        %515 = vmax.xlane.f32.xlu0 %v514
        %v516 = vpop.xlane.xlu0 %515
        %v517 = vsel %vm352, %v473, -inf
        %518 = vmax.xlane.f32.xlu0 %v517
        %v519 = vpop.xlane.xlu0 %518
        %v520 = vsel %vm352, %v474, -inf
        %521 = vmax.xlane.f32.xlu0 %v520
        %v522 = vpop.xlane.xlu0 %521
        %vm523 = vcmp.ge.f32.partialorder %v467, %v501
        %vm524 = vcmp.ge.f32.partialorder %v468, %v504
        %vm525 = vcmp.ge.f32.partialorder %v469, %v507
        %vm526 = vcmp.ge.f32.partialorder %v470, %v510
        %vm527 = vcmp.ge.f32.partialorder %v471, %v513
        %vm528 = vcmp.ge.f32.partialorder %v472, %v516
        %vm529 = vcmp.ge.f32.partialorder %v473, %v519
        %vm530 = vcmp.ge.f32.partialorder %v474, %v522
        %v531 = vsel %vm523, 1, 0
        %v532 = vsel %vm524, 1, 0
        %v533 = vsel %vm525, 1, 0
        %v534 = vsel %vm526, 1, 0
        %v535 = vsel %vm527, 1, 0
        %v536 = vsel %vm528, 1, 0
        %v537 = vsel %vm529, 1, 0
        %v538 = vsel %vm530, 1, 0
        %v539 = vcvt.s32.f32 %v531
        %v540 = vcvt.s32.f32 %v532
        %v541 = vcvt.s32.f32 %v533
        %v542 = vcvt.s32.f32 %v534
        %v543 = vcvt.s32.f32 %v535
        %v544 = vcvt.s32.f32 %v536
        %v545 = vcvt.s32.f32 %v537
        %v546 = vcvt.s32.f32 %v538
        %v547 = vpack.c.bf16 %v540, %v539
        %v548 = vpack.c.bf16 %v542, %v541
        %v549 = vpack.c.bf16 %v544, %v543
        %v550 = vpack.c.bf16 %v546, %v545
        %v552 = vsel %vm352, %v547, 0
        %v555 = vsel %vm352, %v548, 0
        %v558 = vsel %vm352, %v549, 0
        %v561 = vsel %vm352, %v550, 0
        %563 = vmatprep.subr.bf16.mxu0 0
        %564 = vmatpush1.bf16.msra.mxu0 0
        %565 = vmatprep.subr.bf16.mxu0 0
        %566 = vmatpush1.bf16.msra.mxu0 0
        %567 = vmatprep.subr.bf16.mxu0 0
        %568 = vmatpush1.bf16.msra.mxu0 0
        %569 = vmatprep.subr.bf16.mxu0 0
        %570 = vmatpush1.bf16.msra.mxu0 0
        %571 = vmatprep.subr.bf16.mxu0 0
        %572 = vmatpush1.bf16.msra.mxu0 1065369472
        %573 = vmatprep.subr.bf16.mxu0 0
        %574 = vmatpush1.bf16.msra.mxu0 1065369472
        %575 = vmatprep.subr.bf16.mxu0 0
        %576 = vmatpush1.bf16.msra.mxu0 1065369472
        %577 = vmatprep.subr.bf16.mxu0 0
        %578 = vmatpush1.bf16.msra.mxu0 1065369472
        %579 = vmatprep.subr.bf16.mxu0 0
        %580 = vmatpush2.bf16.msra.mxu0 0
        %581 = vmatprep.subr.bf16.mxu0 0
        %582 = vmatpush2.bf16.msra.mxu0 0
        %583 = vmatprep.subr.bf16.mxu0 0
        %584 = vmatpush2.bf16.msra.mxu0 0
        %585 = vmatprep.subr.bf16.mxu0 0
        %586 = vmatpush2.bf16.msra.mxu0 0
        %587 = vmatprep.subr.bf16.mxu0 0
        %588 = vmatpush2.bf16.msra.mxu0 0
        %589 = vmatprep.subr.bf16.mxu0 0
        %590 = vmatpush2.bf16.msra.mxu0 0
        %591 = vmatprep.subr.bf16.mxu0 0
        %592 = vmatpush2.bf16.msra.mxu0 0
        %593 = vmatprep.subr.bf16.mxu0 0
        %594 = vmatpush2.bf16.msra.mxu0 0
        %595 = vmatprep.mubr.bf16.mxu0 0
        %596 = vmatmul.mubr.bf16.gmra.mxu0 %v552
        %v597 = vpop.f32.mrf.mxu0
        %v598 = vadd.f32 0.0, %v597
        %v599 = vpop.f32.mrf.mxu0
        %v600 = vpop.f32.mrf.mxu0
        %v601 = vadd.f32 0.0, %v600
        %v602 = vpop.f32.mrf.mxu0
        %603 = vmatprep.mubr.bf16.mxu0 0
        %604 = vmatmul.mubr.bf16.gmra.mxu0 %v555
        %v605 = vpop.f32.mrf.mxu0
        %v606 = vadd.f32 0.0, %v605
        %v607 = vpop.f32.mrf.mxu0
        %v608 = vpop.f32.mrf.mxu0
        %v609 = vadd.f32 0.0, %v608
        %v610 = vpop.f32.mrf.mxu0
        %611 = vmatprep.mubr.bf16.mxu0 0
        %612 = vmatmul.mubr.bf16.gmra.mxu0 %v558
        %v613 = vpop.f32.mrf.mxu0
        %v614 = vadd.f32 0.0, %v613
        %v615 = vpop.f32.mrf.mxu0
        %v616 = vpop.f32.mrf.mxu0
        %v617 = vadd.f32 0.0, %v616
        %v618 = vpop.f32.mrf.mxu0
        %619 = vmatprep.mubr.bf16.mxu0 0
        %620 = vmatmul.mubr.bf16.gmra.mxu0 %v561
        %v621 = vpop.f32.mrf.mxu0
        %v622 = vadd.f32 0.0, %v621
        %v623 = vpop.f32.mrf.mxu0
        %v624 = vpop.f32.mrf.mxu0
        %v625 = vadd.f32 0.0, %v624
        %v626 = vpop.f32.mrf.mxu0
        %627 = vdwg.mxu0
        %v628 = vsel %vm523, -inf, %v467
        %v629 = vsel %vm524, -inf, %v468
        %v630 = vsel %vm525, -inf, %v469
        %v631 = vsel %vm526, -inf, %v470
        %v632 = vsel %vm527, -inf, %v471
        %v633 = vsel %vm528, -inf, %v472
        %v634 = vsel %vm529, -inf, %v473
        %v635 = vsel %vm530, -inf, %v474
        %v636 = vsel %vm352, %v628, -inf
        %637 = vmax.xlane.f32.xlu0 %v636
        %v638 = vpop.xlane.xlu0 %637
        %v639 = vsel %vm352, %v629, -inf
        %640 = vmax.xlane.f32.xlu0 %v639
        %v641 = vpop.xlane.xlu0 %640
        %v642 = vsel %vm352, %v630, -inf
        %643 = vmax.xlane.f32.xlu0 %v642
        %v644 = vpop.xlane.xlu0 %643
        %v645 = vsel %vm352, %v631, -inf
        %646 = vmax.xlane.f32.xlu0 %v645
        %v647 = vpop.xlane.xlu0 %646
        %v648 = vsel %vm352, %v632, -inf
        %649 = vmax.xlane.f32.xlu0 %v648
        %v650 = vpop.xlane.xlu0 %649
        %v651 = vsel %vm352, %v633, -inf
        %652 = vmax.xlane.f32.xlu0 %v651
        %v653 = vpop.xlane.xlu0 %652
        %v654 = vsel %vm352, %v634, -inf
        %655 = vmax.xlane.f32.xlu0 %v654
        %v656 = vpop.xlane.xlu0 %655
        %v657 = vsel %vm352, %v635, -inf
        %658 = vmax.xlane.f32.xlu0 %v657
        %v659 = vpop.xlane.xlu0 %658
        %vm660 = vcmp.ge.f32.partialorder %v598, 4.0
        %vm661 = vcmp.ge.f32.partialorder %v601, 4.0
        %vm662 = vcmp.ge.f32.partialorder %v606, 4.0
        %vm663 = vcmp.ge.f32.partialorder %v609, 4.0
        %vm664 = vcmp.ge.f32.partialorder %v614, 4.0
        %vm665 = vcmp.ge.f32.partialorder %v617, 4.0
        %vm666 = vcmp.ge.f32.partialorder %v622, 4.0
        %vm667 = vcmp.ge.f32.partialorder %v625, 4.0
        %v668 = vsel %vm660, %v501, %v638
        %v669 = vsel %vm661, %v504, %v641
        %v670 = vsel %vm662, %v507, %v644
        %v671 = vsel %vm663, %v510, %v647
        %v672 = vsel %vm664, %v513, %v650
        %v673 = vsel %vm665, %v516, %v653
        %v674 = vsel %vm666, %v519, %v656
        %v675 = vsel %vm667, %v522, %v659
        %677 = vset.pattern.permute.xlu0 0
        %678 = vperm.xlu0 %677, %v668
        %v679 = vpop.permute.xlu0 %678
        %682 = vset.pattern.permute.xlu0 0
        %683 = vperm.xlu0 %682, %v669
        %v684 = vpop.permute.xlu0 %683
        %687 = vset.pattern.permute.xlu0 0
        %688 = vperm.xlu0 %687, %v670
        %v689 = vpop.permute.xlu0 %688
        %692 = vset.pattern.permute.xlu0 0
        %693 = vperm.xlu0 %692, %v671
        %v694 = vpop.permute.xlu0 %693
        %697 = vset.pattern.permute.xlu0 0
        %698 = vperm.xlu0 %697, %v672
        %v699 = vpop.permute.xlu0 %698
        %702 = vset.pattern.permute.xlu0 0
        %703 = vperm.xlu0 %702, %v673
        %v704 = vpop.permute.xlu0 %703
        %707 = vset.pattern.permute.xlu0 0
        %708 = vperm.xlu0 %707, %v674
        %v709 = vpop.permute.xlu0 %708
        %712 = vset.pattern.permute.xlu0 0
        %713 = vperm.xlu0 %712, %v675
        %v714 = vpop.permute.xlu0 %713
        %vm716 = vcmp.ge.f32.partialorder %v467, %v679
        %vm717 = vcmp.ge.f32.partialorder %v468, %v684
        %vm718 = vcmp.ge.f32.partialorder %v469, %v689
        %vm719 = vcmp.ge.f32.partialorder %v470, %v694
        %vm720 = vcmp.ge.f32.partialorder %v471, %v699
        %vm721 = vcmp.ge.f32.partialorder %v472, %v704
        %vm722 = vcmp.ge.f32.partialorder %v473, %v709
        %vm723 = vcmp.ge.f32.partialorder %v474, %v714
        %v724 = vsel %vm716, 1, 0
        %v725 = vsel %vm717, 1, 0
        %v726 = vsel %vm718, 1, 0
        %v727 = vsel %vm719, 1, 0
        %v728 = vsel %vm720, 1, 0
        %v729 = vsel %vm721, 1, 0
        %v730 = vsel %vm722, 1, 0
        %v731 = vsel %vm723, 1, 0
        %v732 = vcvt.s32.f32 %v724
        %v733 = vcvt.s32.f32 %v725
        %v734 = vcvt.s32.f32 %v726
        %v735 = vcvt.s32.f32 %v727
        %v736 = vcvt.s32.f32 %v728
        %v737 = vcvt.s32.f32 %v729
        %v738 = vcvt.s32.f32 %v730
        %v739 = vcvt.s32.f32 %v731
        %v740 = vpack.c.bf16 %v733, %v732
        %v741 = vpack.c.bf16 %v735, %v734
        %v742 = vpack.c.bf16 %v737, %v736
        %v743 = vpack.c.bf16 %v739, %v738
        %v745 = vsel %vm352, %v740, 0
        %v748 = vsel %vm352, %v741, 0
        %v751 = vsel %vm352, %v742, 0
        %v754 = vsel %vm352, %v743, 0
        %756 = vmatprep.subr.bf16.mxu0 0
        %757 = vmatpush1.bf16.msra.mxu0 0
        %758 = vmatprep.subr.bf16.mxu0 0
        %759 = vmatpush1.bf16.msra.mxu0 0
        %760 = vmatprep.subr.bf16.mxu0 0
        %761 = vmatpush1.bf16.msra.mxu0 0
        %762 = vmatprep.subr.bf16.mxu0 0
        %763 = vmatpush1.bf16.msra.mxu0 0
        %764 = vmatprep.subr.bf16.mxu0 0
        %765 = vmatpush1.bf16.msra.mxu0 1065369472
        %766 = vmatprep.subr.bf16.mxu0 0
        %767 = vmatpush1.bf16.msra.mxu0 1065369472
        %768 = vmatprep.subr.bf16.mxu0 0
        %769 = vmatpush1.bf16.msra.mxu0 1065369472
        %770 = vmatprep.subr.bf16.mxu0 0
        %771 = vmatpush1.bf16.msra.mxu0 1065369472
        %772 = vmatprep.subr.bf16.mxu0 0
        %773 = vmatpush2.bf16.msra.mxu0 0
        %774 = vmatprep.subr.bf16.mxu0 0
        %775 = vmatpush2.bf16.msra.mxu0 0
        %776 = vmatprep.subr.bf16.mxu0 0
        %777 = vmatpush2.bf16.msra.mxu0 0
        %778 = vmatprep.subr.bf16.mxu0 0
        %779 = vmatpush2.bf16.msra.mxu0 0
        %780 = vmatprep.subr.bf16.mxu0 0
        %781 = vmatpush2.bf16.msra.mxu0 0
        %782 = vmatprep.subr.bf16.mxu0 0
        %783 = vmatpush2.bf16.msra.mxu0 0
        %784 = vmatprep.subr.bf16.mxu0 0
        %785 = vmatpush2.bf16.msra.mxu0 0
        %786 = vmatprep.subr.bf16.mxu0 0
        %787 = vmatpush2.bf16.msra.mxu0 0
        %788 = vmatprep.mubr.bf16.mxu0 0
        %789 = vmatmul.mubr.bf16.gmra.mxu0 %v745
        %v790 = vpop.f32.mrf.mxu0
        %v791 = vadd.f32 0.0, %v790
        %v792 = vpop.f32.mrf.mxu0
        %v793 = vpop.f32.mrf.mxu0
        %v794 = vadd.f32 0.0, %v793
        %v795 = vpop.f32.mrf.mxu0
        %796 = vmatprep.mubr.bf16.mxu0 0
        %797 = vmatmul.mubr.bf16.gmra.mxu0 %v748
        %v798 = vpop.f32.mrf.mxu0
        %v799 = vadd.f32 0.0, %v798
        %v800 = vpop.f32.mrf.mxu0
        %v801 = vpop.f32.mrf.mxu0
        %v802 = vadd.f32 0.0, %v801
        %v803 = vpop.f32.mrf.mxu0
        %804 = vmatprep.mubr.bf16.mxu0 0
        %805 = vmatmul.mubr.bf16.gmra.mxu0 %v751
        %v806 = vpop.f32.mrf.mxu0
        %v807 = vadd.f32 0.0, %v806
        %v808 = vpop.f32.mrf.mxu0
        %v809 = vpop.f32.mrf.mxu0
        %v810 = vadd.f32 0.0, %v809
        %v811 = vpop.f32.mrf.mxu0
        %812 = vmatprep.mubr.bf16.mxu0 0
        %813 = vmatmul.mubr.bf16.gmra.mxu0 %v754
        %v814 = vpop.f32.mrf.mxu0
        %v815 = vadd.f32 0.0, %v814
        %v816 = vpop.f32.mrf.mxu0
        %v817 = vpop.f32.mrf.mxu0
        %v818 = vadd.f32 0.0, %v817
        %v819 = vpop.f32.mrf.mxu0
        %820 = vdwg.mxu0
        %v821 = vsel %vm716, -inf, %v467
        %v822 = vsel %vm717, -inf, %v468
        %v823 = vsel %vm718, -inf, %v469
        %v824 = vsel %vm719, -inf, %v470
        %v825 = vsel %vm720, -inf, %v471
        %v826 = vsel %vm721, -inf, %v472
        %v827 = vsel %vm722, -inf, %v473
        %v828 = vsel %vm723, -inf, %v474
        %v829 = vsel %vm352, %v821, -inf
        %830 = vmax.xlane.f32.xlu0 %v829
        %v831 = vpop.xlane.xlu0 %830
        %v832 = vsel %vm352, %v822, -inf
        %833 = vmax.xlane.f32.xlu0 %v832
        %v834 = vpop.xlane.xlu0 %833
        %v835 = vsel %vm352, %v823, -inf
        %836 = vmax.xlane.f32.xlu0 %v835
        %v837 = vpop.xlane.xlu0 %836
        %v838 = vsel %vm352, %v824, -inf
        %839 = vmax.xlane.f32.xlu0 %v838
        %v840 = vpop.xlane.xlu0 %839
        %v841 = vsel %vm352, %v825, -inf
        %842 = vmax.xlane.f32.xlu0 %v841
        %v843 = vpop.xlane.xlu0 %842
        %v844 = vsel %vm352, %v826, -inf
        %845 = vmax.xlane.f32.xlu0 %v844
        %v846 = vpop.xlane.xlu0 %845
        %v847 = vsel %vm352, %v827, -inf
        %848 = vmax.xlane.f32.xlu0 %v847
        %v849 = vpop.xlane.xlu0 %848
        %v850 = vsel %vm352, %v828, -inf
        %851 = vmax.xlane.f32.xlu0 %v850
        %v852 = vpop.xlane.xlu0 %851
        %vm853 = vcmp.ge.f32.partialorder %v791, 4.0
        %vm854 = vcmp.ge.f32.partialorder %v794, 4.0
        %vm855 = vcmp.ge.f32.partialorder %v799, 4.0
        %vm856 = vcmp.ge.f32.partialorder %v802, 4.0
        %vm857 = vcmp.ge.f32.partialorder %v807, 4.0
        %vm858 = vcmp.ge.f32.partialorder %v810, 4.0
        %vm859 = vcmp.ge.f32.partialorder %v815, 4.0
        %vm860 = vcmp.ge.f32.partialorder %v818, 4.0
        %v861 = vsel %vm853, %v668, %v831
        %v862 = vsel %vm854, %v669, %v834
        %v863 = vsel %vm855, %v670, %v837
        %v864 = vsel %vm856, %v671, %v840
        %v865 = vsel %vm857, %v672, %v843
        %v866 = vsel %vm858, %v673, %v846
        %v867 = vsel %vm859, %v674, %v849
        %v868 = vsel %vm860, %v675, %v852
        %870 = vset.pattern.permute.xlu0 0
        %871 = vperm.xlu0 %870, %v861
        %v872 = vpop.permute.xlu0 %871
        %875 = vset.pattern.permute.xlu0 0
        %876 = vperm.xlu0 %875, %v862
        %v877 = vpop.permute.xlu0 %876
        %880 = vset.pattern.permute.xlu0 0
        %881 = vperm.xlu0 %880, %v863
        %v882 = vpop.permute.xlu0 %881
        %885 = vset.pattern.permute.xlu0 0
        %886 = vperm.xlu0 %885, %v864
        %v887 = vpop.permute.xlu0 %886
        %890 = vset.pattern.permute.xlu0 0
        %891 = vperm.xlu0 %890, %v865
        %v892 = vpop.permute.xlu0 %891
        %895 = vset.pattern.permute.xlu0 0
        %896 = vperm.xlu0 %895, %v866
        %v897 = vpop.permute.xlu0 %896
        %900 = vset.pattern.permute.xlu0 0
        %901 = vperm.xlu0 %900, %v867
        %v902 = vpop.permute.xlu0 %901
        %905 = vset.pattern.permute.xlu0 0
        %906 = vperm.xlu0 %905, %v868
        %v907 = vpop.permute.xlu0 %906
        %vm909 = vcmp.ge.f32.partialorder %v467, %v872
        %vm910 = vcmp.ge.f32.partialorder %v468, %v877
        %vm911 = vcmp.ge.f32.partialorder %v469, %v882
        %vm912 = vcmp.ge.f32.partialorder %v470, %v887
        %vm913 = vcmp.ge.f32.partialorder %v471, %v892
        %vm914 = vcmp.ge.f32.partialorder %v472, %v897
        %vm915 = vcmp.ge.f32.partialorder %v473, %v902
        %vm916 = vcmp.ge.f32.partialorder %v474, %v907
        %v917 = vsel %vm909, 1, 0
        %v918 = vsel %vm910, 1, 0
        %v919 = vsel %vm911, 1, 0
        %v920 = vsel %vm912, 1, 0
        %v921 = vsel %vm913, 1, 0
        %v922 = vsel %vm914, 1, 0
        %v923 = vsel %vm915, 1, 0
        %v924 = vsel %vm916, 1, 0
        %v925 = vcvt.s32.f32 %v917
        %v926 = vcvt.s32.f32 %v918
        %v927 = vcvt.s32.f32 %v919
        %v928 = vcvt.s32.f32 %v920
        %v929 = vcvt.s32.f32 %v921
        %v930 = vcvt.s32.f32 %v922
        %v931 = vcvt.s32.f32 %v923
        %v932 = vcvt.s32.f32 %v924
        %v933 = vpack.c.bf16 %v926, %v925
        %v934 = vpack.c.bf16 %v928, %v927
        %v935 = vpack.c.bf16 %v930, %v929
        %v936 = vpack.c.bf16 %v932, %v931
        %v938 = vsel %vm352, %v933, 0
        %v941 = vsel %vm352, %v934, 0
        %v944 = vsel %vm352, %v935, 0
        %v947 = vsel %vm352, %v936, 0
        %949 = vmatprep.subr.bf16.mxu0 0
        %950 = vmatpush1.bf16.msra.mxu0 0
        %951 = vmatprep.subr.bf16.mxu0 0
        %952 = vmatpush1.bf16.msra.mxu0 0
        %953 = vmatprep.subr.bf16.mxu0 0
        %954 = vmatpush1.bf16.msra.mxu0 0
        %955 = vmatprep.subr.bf16.mxu0 0
        %956 = vmatpush1.bf16.msra.mxu0 0
        %957 = vmatprep.subr.bf16.mxu0 0
        %958 = vmatpush1.bf16.msra.mxu0 1065369472
        %959 = vmatprep.subr.bf16.mxu0 0
        %960 = vmatpush1.bf16.msra.mxu0 1065369472
        %961 = vmatprep.subr.bf16.mxu0 0
        %962 = vmatpush1.bf16.msra.mxu0 1065369472
        %963 = vmatprep.subr.bf16.mxu0 0
        %964 = vmatpush1.bf16.msra.mxu0 1065369472
        %965 = vmatprep.subr.bf16.mxu0 0
        %966 = vmatpush2.bf16.msra.mxu0 0
        %967 = vmatprep.subr.bf16.mxu0 0
        %968 = vmatpush2.bf16.msra.mxu0 0
        %969 = vmatprep.subr.bf16.mxu0 0
        %970 = vmatpush2.bf16.msra.mxu0 0
        %971 = vmatprep.subr.bf16.mxu0 0
        %972 = vmatpush2.bf16.msra.mxu0 0
        %973 = vmatprep.subr.bf16.mxu0 0
        %974 = vmatpush2.bf16.msra.mxu0 0
        %975 = vmatprep.subr.bf16.mxu0 0
        %976 = vmatpush2.bf16.msra.mxu0 0
        %977 = vmatprep.subr.bf16.mxu0 0
        %978 = vmatpush2.bf16.msra.mxu0 0
        %979 = vmatprep.subr.bf16.mxu0 0
        %980 = vmatpush2.bf16.msra.mxu0 0
        %981 = vmatprep.mubr.bf16.mxu0 0
        %982 = vmatmul.mubr.bf16.gmra.mxu0 %v938
        %v983 = vpop.f32.mrf.mxu0
        %v984 = vadd.f32 0.0, %v983
        %v985 = vpop.f32.mrf.mxu0
        %v986 = vpop.f32.mrf.mxu0
        %v987 = vadd.f32 0.0, %v986
        %v988 = vpop.f32.mrf.mxu0
        %989 = vmatprep.mubr.bf16.mxu0 0
        %990 = vmatmul.mubr.bf16.gmra.mxu0 %v941
        %v991 = vpop.f32.mrf.mxu0
        %v992 = vadd.f32 0.0, %v991
        %v993 = vpop.f32.mrf.mxu0
        %v994 = vpop.f32.mrf.mxu0
        %v995 = vadd.f32 0.0, %v994
        %v996 = vpop.f32.mrf.mxu0
        %997 = vmatprep.mubr.bf16.mxu0 0
        %998 = vmatmul.mubr.bf16.gmra.mxu0 %v944
        %v999 = vpop.f32.mrf.mxu0
        %v1000 = vadd.f32 0.0, %v999
        %v1001 = vpop.f32.mrf.mxu0
        %v1002 = vpop.f32.mrf.mxu0
        %v1003 = vadd.f32 0.0, %v1002
        %v1004 = vpop.f32.mrf.mxu0
        %1005 = vmatprep.mubr.bf16.mxu0 0
        %1006 = vmatmul.mubr.bf16.gmra.mxu0 %v947
        %v1007 = vpop.f32.mrf.mxu0
        %v1008 = vadd.f32 0.0, %v1007
        %v1009 = vpop.f32.mrf.mxu0
        %v1010 = vpop.f32.mrf.mxu0
        %v1011 = vadd.f32 0.0, %v1010
        %v1012 = vpop.f32.mrf.mxu0
        %1013 = vdwg.mxu0
        %v1014 = vsel %vm909, -inf, %v467
        %v1015 = vsel %vm910, -inf, %v468
        %v1016 = vsel %vm911, -inf, %v469
        %v1017 = vsel %vm912, -inf, %v470
        %v1018 = vsel %vm913, -inf, %v471
        %v1019 = vsel %vm914, -inf, %v472
        %v1020 = vsel %vm915, -inf, %v473
        %v1021 = vsel %vm916, -inf, %v474
        %v1022 = vsel %vm352, %v1014, -inf
        %1023 = vmax.xlane.f32.xlu0 %v1022
        %v1024 = vpop.xlane.xlu0 %1023
        %v1025 = vsel %vm352, %v1015, -inf
        %1026 = vmax.xlane.f32.xlu0 %v1025
        %v1027 = vpop.xlane.xlu0 %1026
        %v1028 = vsel %vm352, %v1016, -inf
        %1029 = vmax.xlane.f32.xlu0 %v1028
        %v1030 = vpop.xlane.xlu0 %1029
        %v1031 = vsel %vm352, %v1017, -inf
        %1032 = vmax.xlane.f32.xlu0 %v1031
        %v1033 = vpop.xlane.xlu0 %1032
        %v1034 = vsel %vm352, %v1018, -inf
        %1035 = vmax.xlane.f32.xlu0 %v1034
        %v1036 = vpop.xlane.xlu0 %1035
        %v1037 = vsel %vm352, %v1019, -inf
        %1038 = vmax.xlane.f32.xlu0 %v1037
        %v1039 = vpop.xlane.xlu0 %1038
        %v1040 = vsel %vm352, %v1020, -inf
        %1041 = vmax.xlane.f32.xlu0 %v1040
        %v1042 = vpop.xlane.xlu0 %1041
        %v1043 = vsel %vm352, %v1021, -inf
        %1044 = vmax.xlane.f32.xlu0 %v1043
        %v1045 = vpop.xlane.xlu0 %1044
        %vm1046 = vcmp.ge.f32.partialorder %v984, 4.0
        %vm1047 = vcmp.ge.f32.partialorder %v987, 4.0
        %vm1048 = vcmp.ge.f32.partialorder %v992, 4.0
        %vm1049 = vcmp.ge.f32.partialorder %v995, 4.0
        %vm1050 = vcmp.ge.f32.partialorder %v1000, 4.0
        %vm1051 = vcmp.ge.f32.partialorder %v1003, 4.0
        %vm1052 = vcmp.ge.f32.partialorder %v1008, 4.0
        %vm1053 = vcmp.ge.f32.partialorder %v1011, 4.0
        %v1054 = vsel %vm1046, %v861, %v1024
        %v1055 = vsel %vm1047, %v862, %v1027
        %v1056 = vsel %vm1048, %v863, %v1030
        %v1057 = vsel %vm1049, %v864, %v1033
        %v1058 = vsel %vm1050, %v865, %v1036
        %v1059 = vsel %vm1051, %v866, %v1039
        %v1060 = vsel %vm1052, %v867, %v1042
        %v1061 = vsel %vm1053, %v868, %v1045
        %1063 = vset.pattern.permute.xlu0 0
        %1064 = vperm.xlu0 %1063, %v1054
        %v1065 = vpop.permute.xlu0 %1064
        %1068 = vset.pattern.permute.xlu0 0
        %1069 = vperm.xlu0 %1068, %v1055
        %v1070 = vpop.permute.xlu0 %1069
        %1073 = vset.pattern.permute.xlu0 0
        %1074 = vperm.xlu0 %1073, %v1056
        %v1075 = vpop.permute.xlu0 %1074
        %1078 = vset.pattern.permute.xlu0 0
        %1079 = vperm.xlu0 %1078, %v1057
        %v1080 = vpop.permute.xlu0 %1079
        %1083 = vset.pattern.permute.xlu0 0
        %1084 = vperm.xlu0 %1083, %v1058
        %v1085 = vpop.permute.xlu0 %1084
        %1088 = vset.pattern.permute.xlu0 0
        %1089 = vperm.xlu0 %1088, %v1059
        %v1090 = vpop.permute.xlu0 %1089
        %1093 = vset.pattern.permute.xlu0 0
        %1094 = vperm.xlu0 %1093, %v1060
        %v1095 = vpop.permute.xlu0 %1094
        %1098 = vset.pattern.permute.xlu0 0
        %1099 = vperm.xlu0 %1098, %v1061
        %v1100 = vpop.permute.xlu0 %1099
        %vm1102 = vcmp.lt.f32.partialorder %v467, %v1065
        %vm1103 = vcmp.lt.f32.partialorder %v468, %v1070
        %vm1104 = vcmp.lt.f32.partialorder %v469, %v1075
        %vm1105 = vcmp.lt.f32.partialorder %v470, %v1080
        %vm1106 = vcmp.lt.f32.partialorder %v471, %v1085
        %vm1107 = vcmp.lt.f32.partialorder %v472, %v1090
        %vm1108 = vcmp.lt.f32.partialorder %v473, %v1095
        %vm1109 = vcmp.lt.f32.partialorder %v474, %v1100
        %v1110 = vsel %vm1102, %v477, %v467
        %v1111 = vsel %vm1103, %v480, %v468
        %v1112 = vsel %vm1104, %v483, %v469
        %v1113 = vsel %vm1105, %v486, %v470
        %v1114 = vsel %vm1106, %v489, %v471
        %v1115 = vsel %vm1107, %v492, %v472
        %v1116 = vsel %vm1108, %v495, %v473
        %v1117 = vsel %vm1109, %v498, %v474
        %v1118 = vsel %vm352, %v1110, -inf
        %v1119 = vsel %vm352, %v1111, -inf
        %v1120 = vsel %vm352, %v1112, -inf
        %v1121 = vsel %vm352, %v1113, -inf
        %v1122 = vsel %vm352, %v1114, -inf
        %v1123 = vmax.f32 %v1118, %v1122
        %v1124 = vsel %vm352, %v1115, -inf
        %v1125 = vmax.f32 %v1119, %v1124
        %v1126 = vsel %vm352, %v1116, -inf
        %v1127 = vmax.f32 %v1120, %v1126
        %v1128 = vsel %vm352, %v1117, -inf
        %v1129 = vmax.f32 %v1121, %v1128
        %v1130 = vmax.f32 %v1123, %v1125
        %v1131 = vmax.f32 %v1127, %v1129
        %v1132 = vmax.f32 %v1130, %v1131
        %v1133 = vrot.slane %v1132, 4
        %v1134 = vmax.f32 %v1132, %v1133
        %v1135 = vrot.slane %v1134, 2
        %v1136 = vmax.f32 %v1134, %v1135
        %v1137 = vrot.slane %v1136, 1
        %v1138 = vmax.f32 %v1136, %v1137
        %1139 = vset.pattern.permute.xlu0 3
        %1140 = vperm.xlu0 %1139, %v296
        %v1141 = vpop.permute.xlu0 %1140
        %1143 = vset.pattern.permute.xlu0 3
        %1144 = vperm.xlu0 %1143, %v297
        %v1145 = vpop.permute.xlu0 %1144
        %1147 = vset.pattern.permute.xlu0 3
        %1148 = vperm.xlu0 %1147, %v298
        %v1149 = vpop.permute.xlu0 %1148
        %1151 = vset.pattern.permute.xlu0 3
        %1152 = vperm.xlu0 %1151, %v299
        %v1153 = vpop.permute.xlu0 %1152
        %1155 = vset.pattern.permute.xlu0 3
        %1156 = vperm.xlu0 %1155, %v300
        %v1157 = vpop.permute.xlu0 %1156
        %1159 = vset.pattern.permute.xlu0 3
        %1160 = vperm.xlu0 %1159, %v301
        %v1161 = vpop.permute.xlu0 %1160
        %1163 = vset.pattern.permute.xlu0 3
        %1164 = vperm.xlu0 %1163, %v302
        %v1165 = vpop.permute.xlu0 %1164
        %1167 = vset.pattern.permute.xlu0 3
        %1168 = vperm.xlu0 %1167, %v303
        %v1169 = vpop.permute.xlu0 %1168
        %v1171 = vmul.f32 %v288, %v1141
        %v1172 = vmul.f32 %v289, %v1145
        %v1173 = vmul.f32 %v290, %v1149
        %v1174 = vmul.f32 %v291, %v1153
        %v1175 = vmul.f32 %v292, %v1157
        %v1176 = vmul.f32 %v293, %v1161
        %v1177 = vmul.f32 %v294, %v1165
        %v1178 = vmul.f32 %v295, %v1169
        %v1179 = vsel %vm352, %v1171, inf
        %1180 = vmin.xlane.f32.xlu0 %v1179
        %v1181 = vpop.xlane.xlu0 %1180
        %v1182 = vsel %vm352, %v1172, inf
        %1183 = vmin.xlane.f32.xlu0 %v1182
        %v1184 = vpop.xlane.xlu0 %1183
        %v1185 = vsel %vm352, %v1173, inf
        %1186 = vmin.xlane.f32.xlu0 %v1185
        %v1187 = vpop.xlane.xlu0 %1186
        %v1188 = vsel %vm352, %v1174, inf
        %1189 = vmin.xlane.f32.xlu0 %v1188
        %v1190 = vpop.xlane.xlu0 %1189
        %v1191 = vsel %vm352, %v1175, inf
        %1192 = vmin.xlane.f32.xlu0 %v1191
        %v1193 = vpop.xlane.xlu0 %1192
        %v1194 = vsel %vm352, %v1176, inf
        %1195 = vmin.xlane.f32.xlu0 %v1194
        %v1196 = vpop.xlane.xlu0 %1195
        %v1197 = vsel %vm352, %v1177, inf
        %1198 = vmin.xlane.f32.xlu0 %v1197
        %v1199 = vpop.xlane.xlu0 %1198
        %v1200 = vsel %vm352, %v1178, inf
        %1201 = vmin.xlane.f32.xlu0 %v1200
        %v1202 = vpop.xlane.xlu0 %1201
        %v1203 = vsel %vm352, %v1171, -inf
        %1204 = vmax.xlane.f32.xlu0 %v1203
        %v1205 = vpop.xlane.xlu0 %1204
        %v1206 = vsel %vm352, %v1172, -inf
        %1207 = vmax.xlane.f32.xlu0 %v1206
        %v1208 = vpop.xlane.xlu0 %1207
        %v1209 = vsel %vm352, %v1173, -inf
        %1210 = vmax.xlane.f32.xlu0 %v1209
        %v1211 = vpop.xlane.xlu0 %1210
        %v1212 = vsel %vm352, %v1174, -inf
        %1213 = vmax.xlane.f32.xlu0 %v1212
        %v1214 = vpop.xlane.xlu0 %1213
        %v1215 = vsel %vm352, %v1175, -inf
        %1216 = vmax.xlane.f32.xlu0 %v1215
        %v1217 = vpop.xlane.xlu0 %1216
        %v1218 = vsel %vm352, %v1176, -inf
        %1219 = vmax.xlane.f32.xlu0 %v1218
        %v1220 = vpop.xlane.xlu0 %1219
        %v1221 = vsel %vm352, %v1177, -inf
        %1222 = vmax.xlane.f32.xlu0 %v1221
        %v1223 = vpop.xlane.xlu0 %1222
        %v1224 = vsel %vm352, %v1178, -inf
        %1225 = vmax.xlane.f32.xlu0 %v1224
        %v1226 = vpop.xlane.xlu0 %1225
        %vm1227 = vcmp.ge.f32.partialorder %v1171, %v1205
        %vm1228 = vcmp.ge.f32.partialorder %v1172, %v1208
        %vm1229 = vcmp.ge.f32.partialorder %v1173, %v1211
        %vm1230 = vcmp.ge.f32.partialorder %v1174, %v1214
        %vm1231 = vcmp.ge.f32.partialorder %v1175, %v1217
        %vm1232 = vcmp.ge.f32.partialorder %v1176, %v1220
        %vm1233 = vcmp.ge.f32.partialorder %v1177, %v1223
        %vm1234 = vcmp.ge.f32.partialorder %v1178, %v1226
        %v1235 = vsel %vm1227, 1, 0
        %v1236 = vsel %vm1228, 1, 0
        %v1237 = vsel %vm1229, 1, 0
        %v1238 = vsel %vm1230, 1, 0
        %v1239 = vsel %vm1231, 1, 0
        %v1240 = vsel %vm1232, 1, 0
        %v1241 = vsel %vm1233, 1, 0
        %v1242 = vsel %vm1234, 1, 0
        %v1243 = vcvt.s32.f32 %v1235
        %v1244 = vcvt.s32.f32 %v1236
        %v1245 = vcvt.s32.f32 %v1237
        %v1246 = vcvt.s32.f32 %v1238
        %v1247 = vcvt.s32.f32 %v1239
        %v1248 = vcvt.s32.f32 %v1240
        %v1249 = vcvt.s32.f32 %v1241
        %v1250 = vcvt.s32.f32 %v1242
        %v1251 = vpack.c.bf16 %v1244, %v1243
        %v1252 = vpack.c.bf16 %v1246, %v1245
        %v1253 = vpack.c.bf16 %v1248, %v1247
        %v1254 = vpack.c.bf16 %v1250, %v1249
        %v1256 = vsel %vm352, %v1251, 0
        %v1259 = vsel %vm352, %v1252, 0
        %v1262 = vsel %vm352, %v1253, 0
        %v1265 = vsel %vm352, %v1254, 0
        %1267 = vmatprep.subr.bf16.mxu0 0
        %1268 = vmatpush1.bf16.msra.mxu0 0
        %1269 = vmatprep.subr.bf16.mxu0 0
        %1270 = vmatpush1.bf16.msra.mxu0 0
        %1271 = vmatprep.subr.bf16.mxu0 0
        %1272 = vmatpush1.bf16.msra.mxu0 0
        %1273 = vmatprep.subr.bf16.mxu0 0
        %1274 = vmatpush1.bf16.msra.mxu0 0
        %1275 = vmatprep.subr.bf16.mxu0 0
        %1276 = vmatpush1.bf16.msra.mxu0 1065369472
        %1277 = vmatprep.subr.bf16.mxu0 0
        %1278 = vmatpush1.bf16.msra.mxu0 1065369472
        %1279 = vmatprep.subr.bf16.mxu0 0
        %1280 = vmatpush1.bf16.msra.mxu0 1065369472
        %1281 = vmatprep.subr.bf16.mxu0 0
        %1282 = vmatpush1.bf16.msra.mxu0 1065369472
        %1283 = vmatprep.subr.bf16.mxu0 0
        %1284 = vmatpush2.bf16.msra.mxu0 0
        %1285 = vmatprep.subr.bf16.mxu0 0
        %1286 = vmatpush2.bf16.msra.mxu0 0
        %1287 = vmatprep.subr.bf16.mxu0 0
        %1288 = vmatpush2.bf16.msra.mxu0 0
        %1289 = vmatprep.subr.bf16.mxu0 0
        %1290 = vmatpush2.bf16.msra.mxu0 0
        %1291 = vmatprep.subr.bf16.mxu0 0
        %1292 = vmatpush2.bf16.msra.mxu0 0
        %1293 = vmatprep.subr.bf16.mxu0 0
        %1294 = vmatpush2.bf16.msra.mxu0 0
        %1295 = vmatprep.subr.bf16.mxu0 0
        %1296 = vmatpush2.bf16.msra.mxu0 0
        %1297 = vmatprep.subr.bf16.mxu0 0
        %1298 = vmatpush2.bf16.msra.mxu0 0
        %1299 = vmatprep.mubr.bf16.mxu0 0
        %1300 = vmatmul.mubr.bf16.gmra.mxu0 %v1256
        %v1301 = vpop.f32.mrf.mxu0
        %v1302 = vadd.f32 0.0, %v1301
        %v1303 = vpop.f32.mrf.mxu0
        %v1304 = vpop.f32.mrf.mxu0
        %v1305 = vadd.f32 0.0, %v1304
        %v1306 = vpop.f32.mrf.mxu0
        %1307 = vmatprep.mubr.bf16.mxu0 0
        %1308 = vmatmul.mubr.bf16.gmra.mxu0 %v1259
        %v1309 = vpop.f32.mrf.mxu0
        %v1310 = vadd.f32 0.0, %v1309
        %v1311 = vpop.f32.mrf.mxu0
        %v1312 = vpop.f32.mrf.mxu0
        %v1313 = vadd.f32 0.0, %v1312
        %v1314 = vpop.f32.mrf.mxu0
        %1315 = vmatprep.mubr.bf16.mxu0 0
        %1316 = vmatmul.mubr.bf16.gmra.mxu0 %v1262
        %v1317 = vpop.f32.mrf.mxu0
        %v1318 = vadd.f32 0.0, %v1317
        %v1319 = vpop.f32.mrf.mxu0
        %v1320 = vpop.f32.mrf.mxu0
        %v1321 = vadd.f32 0.0, %v1320
        %v1322 = vpop.f32.mrf.mxu0
        %1323 = vmatprep.mubr.bf16.mxu0 0
        %1324 = vmatmul.mubr.bf16.gmra.mxu0 %v1265
        %v1325 = vpop.f32.mrf.mxu0
        %v1326 = vadd.f32 0.0, %v1325
        %v1327 = vpop.f32.mrf.mxu0
        %v1328 = vpop.f32.mrf.mxu0
        %v1329 = vadd.f32 0.0, %v1328
        %v1330 = vpop.f32.mrf.mxu0
        %1331 = vdwg.mxu0
        %v1332 = vsel %vm1227, -inf, %v1171
        %v1333 = vsel %vm1228, -inf, %v1172
        %v1334 = vsel %vm1229, -inf, %v1173
        %v1335 = vsel %vm1230, -inf, %v1174
        %v1336 = vsel %vm1231, -inf, %v1175
        %v1337 = vsel %vm1232, -inf, %v1176
        %v1338 = vsel %vm1233, -inf, %v1177
        %v1339 = vsel %vm1234, -inf, %v1178
        %v1340 = vsel %vm352, %v1332, -inf
        %1341 = vmax.xlane.f32.xlu0 %v1340
        %v1342 = vpop.xlane.xlu0 %1341
        %v1343 = vsel %vm352, %v1333, -inf
        %1344 = vmax.xlane.f32.xlu0 %v1343
        %v1345 = vpop.xlane.xlu0 %1344
        %v1346 = vsel %vm352, %v1334, -inf
        %1347 = vmax.xlane.f32.xlu0 %v1346
        %v1348 = vpop.xlane.xlu0 %1347
        %v1349 = vsel %vm352, %v1335, -inf
        %1350 = vmax.xlane.f32.xlu0 %v1349
        %v1351 = vpop.xlane.xlu0 %1350
        %v1352 = vsel %vm352, %v1336, -inf
        %1353 = vmax.xlane.f32.xlu0 %v1352
        %v1354 = vpop.xlane.xlu0 %1353
        %v1355 = vsel %vm352, %v1337, -inf
        %1356 = vmax.xlane.f32.xlu0 %v1355
        %v1357 = vpop.xlane.xlu0 %1356
        %v1358 = vsel %vm352, %v1338, -inf
        %1359 = vmax.xlane.f32.xlu0 %v1358
        %v1360 = vpop.xlane.xlu0 %1359
        %v1361 = vsel %vm352, %v1339, -inf
        %1362 = vmax.xlane.f32.xlu0 %v1361
        %v1363 = vpop.xlane.xlu0 %1362
        %vm1364 = vcmp.ge.f32.partialorder %v1302, 4.0
        %vm1365 = vcmp.ge.f32.partialorder %v1305, 4.0
        %vm1366 = vcmp.ge.f32.partialorder %v1310, 4.0
        %vm1367 = vcmp.ge.f32.partialorder %v1313, 4.0
        %vm1368 = vcmp.ge.f32.partialorder %v1318, 4.0
        %vm1369 = vcmp.ge.f32.partialorder %v1321, 4.0
        %vm1370 = vcmp.ge.f32.partialorder %v1326, 4.0
        %vm1371 = vcmp.ge.f32.partialorder %v1329, 4.0
        %v1372 = vsel %vm1364, %v1205, %v1342
        %v1373 = vsel %vm1365, %v1208, %v1345
        %v1374 = vsel %vm1366, %v1211, %v1348
        %v1375 = vsel %vm1367, %v1214, %v1351
        %v1376 = vsel %vm1368, %v1217, %v1354
        %v1377 = vsel %vm1369, %v1220, %v1357
        %v1378 = vsel %vm1370, %v1223, %v1360
        %v1379 = vsel %vm1371, %v1226, %v1363
        %1381 = vset.pattern.permute.xlu0 0
        %1382 = vperm.xlu0 %1381, %v1372
        %v1383 = vpop.permute.xlu0 %1382
        %1386 = vset.pattern.permute.xlu0 0
        %1387 = vperm.xlu0 %1386, %v1373
        %v1388 = vpop.permute.xlu0 %1387
        %1391 = vset.pattern.permute.xlu0 0
        %1392 = vperm.xlu0 %1391, %v1374
        %v1393 = vpop.permute.xlu0 %1392
        %1396 = vset.pattern.permute.xlu0 0
        %1397 = vperm.xlu0 %1396, %v1375
        %v1398 = vpop.permute.xlu0 %1397
        %1401 = vset.pattern.permute.xlu0 0
        %1402 = vperm.xlu0 %1401, %v1376
        %v1403 = vpop.permute.xlu0 %1402
        %1406 = vset.pattern.permute.xlu0 0
        %1407 = vperm.xlu0 %1406, %v1377
        %v1408 = vpop.permute.xlu0 %1407
        %1411 = vset.pattern.permute.xlu0 0
        %1412 = vperm.xlu0 %1411, %v1378
        %v1413 = vpop.permute.xlu0 %1412
        %1416 = vset.pattern.permute.xlu0 0
        %1417 = vperm.xlu0 %1416, %v1379
        %v1418 = vpop.permute.xlu0 %1417
        %vm1420 = vcmp.ge.f32.partialorder %v1171, %v1383
        %vm1421 = vcmp.ge.f32.partialorder %v1172, %v1388
        %vm1422 = vcmp.ge.f32.partialorder %v1173, %v1393
        %vm1423 = vcmp.ge.f32.partialorder %v1174, %v1398
        %vm1424 = vcmp.ge.f32.partialorder %v1175, %v1403
        %vm1425 = vcmp.ge.f32.partialorder %v1176, %v1408
        %vm1426 = vcmp.ge.f32.partialorder %v1177, %v1413
        %vm1427 = vcmp.ge.f32.partialorder %v1178, %v1418
        %v1428 = vsel %vm1420, 1, 0
        %v1429 = vsel %vm1421, 1, 0
        %v1430 = vsel %vm1422, 1, 0
        %v1431 = vsel %vm1423, 1, 0
        %v1432 = vsel %vm1424, 1, 0
        %v1433 = vsel %vm1425, 1, 0
        %v1434 = vsel %vm1426, 1, 0
        %v1435 = vsel %vm1427, 1, 0
        %v1436 = vcvt.s32.f32 %v1428
        %v1437 = vcvt.s32.f32 %v1429
        %v1438 = vcvt.s32.f32 %v1430
        %v1439 = vcvt.s32.f32 %v1431
        %v1440 = vcvt.s32.f32 %v1432
        %v1441 = vcvt.s32.f32 %v1433
        %v1442 = vcvt.s32.f32 %v1434
        %v1443 = vcvt.s32.f32 %v1435
        %v1444 = vpack.c.bf16 %v1437, %v1436
        %v1445 = vpack.c.bf16 %v1439, %v1438
        %v1446 = vpack.c.bf16 %v1441, %v1440
        %v1447 = vpack.c.bf16 %v1443, %v1442
        %v1449 = vsel %vm352, %v1444, 0
        %v1452 = vsel %vm352, %v1445, 0
        %v1455 = vsel %vm352, %v1446, 0
        %v1458 = vsel %vm352, %v1447, 0
        %1460 = vmatprep.subr.bf16.mxu0 0
        %1461 = vmatpush1.bf16.msra.mxu0 0
        %1462 = vmatprep.subr.bf16.mxu0 0
        %1463 = vmatpush1.bf16.msra.mxu0 0
        %1464 = vmatprep.subr.bf16.mxu0 0
        %1465 = vmatpush1.bf16.msra.mxu0 0
        %1466 = vmatprep.subr.bf16.mxu0 0
        %1467 = vmatpush1.bf16.msra.mxu0 0
        %1468 = vmatprep.subr.bf16.mxu0 0
        %1469 = vmatpush1.bf16.msra.mxu0 1065369472
        %1470 = vmatprep.subr.bf16.mxu0 0
        %1471 = vmatpush1.bf16.msra.mxu0 1065369472
        %1472 = vmatprep.subr.bf16.mxu0 0
        %1473 = vmatpush1.bf16.msra.mxu0 1065369472
        %1474 = vmatprep.subr.bf16.mxu0 0
        %1475 = vmatpush1.bf16.msra.mxu0 1065369472
        %1476 = vmatprep.subr.bf16.mxu0 0
        %1477 = vmatpush2.bf16.msra.mxu0 0
        %1478 = vmatprep.subr.bf16.mxu0 0
        %1479 = vmatpush2.bf16.msra.mxu0 0
        %1480 = vmatprep.subr.bf16.mxu0 0
        %1481 = vmatpush2.bf16.msra.mxu0 0
        %1482 = vmatprep.subr.bf16.mxu0 0
        %1483 = vmatpush2.bf16.msra.mxu0 0
        %1484 = vmatprep.subr.bf16.mxu0 0
        %1485 = vmatpush2.bf16.msra.mxu0 0
        %1486 = vmatprep.subr.bf16.mxu0 0
        %1487 = vmatpush2.bf16.msra.mxu0 0
        %1488 = vmatprep.subr.bf16.mxu0 0
        %1489 = vmatpush2.bf16.msra.mxu0 0
        %1490 = vmatprep.subr.bf16.mxu0 0
        %1491 = vmatpush2.bf16.msra.mxu0 0
        %1492 = vmatprep.mubr.bf16.mxu0 0
        %1493 = vmatmul.mubr.bf16.gmra.mxu0 %v1449
        %v1494 = vpop.f32.mrf.mxu0
        %v1495 = vadd.f32 0.0, %v1494
        %v1496 = vpop.f32.mrf.mxu0
        %v1497 = vpop.f32.mrf.mxu0
        %v1498 = vadd.f32 0.0, %v1497
        %v1499 = vpop.f32.mrf.mxu0
        %1500 = vmatprep.mubr.bf16.mxu0 0
        %1501 = vmatmul.mubr.bf16.gmra.mxu0 %v1452
        %v1502 = vpop.f32.mrf.mxu0
        %v1503 = vadd.f32 0.0, %v1502
        %v1504 = vpop.f32.mrf.mxu0
        %v1505 = vpop.f32.mrf.mxu0
        %v1506 = vadd.f32 0.0, %v1505
        %v1507 = vpop.f32.mrf.mxu0
        %1508 = vmatprep.mubr.bf16.mxu0 0
        %1509 = vmatmul.mubr.bf16.gmra.mxu0 %v1455
        %v1510 = vpop.f32.mrf.mxu0
        %v1511 = vadd.f32 0.0, %v1510
        %v1512 = vpop.f32.mrf.mxu0
        %v1513 = vpop.f32.mrf.mxu0
        %v1514 = vadd.f32 0.0, %v1513
        %v1515 = vpop.f32.mrf.mxu0
        %1516 = vmatprep.mubr.bf16.mxu0 0
        %1517 = vmatmul.mubr.bf16.gmra.mxu0 %v1458
        %v1518 = vpop.f32.mrf.mxu0
        %v1519 = vadd.f32 0.0, %v1518
        %v1520 = vpop.f32.mrf.mxu0
        %v1521 = vpop.f32.mrf.mxu0
        %v1522 = vadd.f32 0.0, %v1521
        %v1523 = vpop.f32.mrf.mxu0
        %1524 = vdwg.mxu0
        %v1525 = vsel %vm1420, -inf, %v1171
        %v1526 = vsel %vm1421, -inf, %v1172
        %v1527 = vsel %vm1422, -inf, %v1173
        %v1528 = vsel %vm1423, -inf, %v1174
        %v1529 = vsel %vm1424, -inf, %v1175
        %v1530 = vsel %vm1425, -inf, %v1176
        %v1531 = vsel %vm1426, -inf, %v1177
        %v1532 = vsel %vm1427, -inf, %v1178
        %v1533 = vsel %vm352, %v1525, -inf
        %1534 = vmax.xlane.f32.xlu0 %v1533
        %v1535 = vpop.xlane.xlu0 %1534
        %v1536 = vsel %vm352, %v1526, -inf
        %1537 = vmax.xlane.f32.xlu0 %v1536
        %v1538 = vpop.xlane.xlu0 %1537
        %v1539 = vsel %vm352, %v1527, -inf
        %1540 = vmax.xlane.f32.xlu0 %v1539
        %v1541 = vpop.xlane.xlu0 %1540
        %v1542 = vsel %vm352, %v1528, -inf
        %1543 = vmax.xlane.f32.xlu0 %v1542
        %v1544 = vpop.xlane.xlu0 %1543
        %v1545 = vsel %vm352, %v1529, -inf
        %1546 = vmax.xlane.f32.xlu0 %v1545
        %v1547 = vpop.xlane.xlu0 %1546
        %v1548 = vsel %vm352, %v1530, -inf
        %1549 = vmax.xlane.f32.xlu0 %v1548
        %v1550 = vpop.xlane.xlu0 %1549
        %v1551 = vsel %vm352, %v1531, -inf
        %1552 = vmax.xlane.f32.xlu0 %v1551
        %v1553 = vpop.xlane.xlu0 %1552
        %v1554 = vsel %vm352, %v1532, -inf
        %1555 = vmax.xlane.f32.xlu0 %v1554
        %v1556 = vpop.xlane.xlu0 %1555
        %vm1557 = vcmp.ge.f32.partialorder %v1495, 4.0
        %vm1558 = vcmp.ge.f32.partialorder %v1498, 4.0
        %vm1559 = vcmp.ge.f32.partialorder %v1503, 4.0
        %vm1560 = vcmp.ge.f32.partialorder %v1506, 4.0
        %vm1561 = vcmp.ge.f32.partialorder %v1511, 4.0
        %vm1562 = vcmp.ge.f32.partialorder %v1514, 4.0
        %vm1563 = vcmp.ge.f32.partialorder %v1519, 4.0
        %vm1564 = vcmp.ge.f32.partialorder %v1522, 4.0
        %v1565 = vsel %vm1557, %v1372, %v1535
        %v1566 = vsel %vm1558, %v1373, %v1538
        %v1567 = vsel %vm1559, %v1374, %v1541
        %v1568 = vsel %vm1560, %v1375, %v1544
        %v1569 = vsel %vm1561, %v1376, %v1547
        %v1570 = vsel %vm1562, %v1377, %v1550
        %v1571 = vsel %vm1563, %v1378, %v1553
        %v1572 = vsel %vm1564, %v1379, %v1556
        %1574 = vset.pattern.permute.xlu0 0
        %1575 = vperm.xlu0 %1574, %v1565
        %v1576 = vpop.permute.xlu0 %1575
        %1579 = vset.pattern.permute.xlu0 0
        %1580 = vperm.xlu0 %1579, %v1566
        %v1581 = vpop.permute.xlu0 %1580
        %1584 = vset.pattern.permute.xlu0 0
        %1585 = vperm.xlu0 %1584, %v1567
        %v1586 = vpop.permute.xlu0 %1585
        %1589 = vset.pattern.permute.xlu0 0
        %1590 = vperm.xlu0 %1589, %v1568
        %v1591 = vpop.permute.xlu0 %1590
        %1594 = vset.pattern.permute.xlu0 0
        %1595 = vperm.xlu0 %1594, %v1569
        %v1596 = vpop.permute.xlu0 %1595
        %1599 = vset.pattern.permute.xlu0 0
        %1600 = vperm.xlu0 %1599, %v1570
        %v1601 = vpop.permute.xlu0 %1600
        %1604 = vset.pattern.permute.xlu0 0
        %1605 = vperm.xlu0 %1604, %v1571
        %v1606 = vpop.permute.xlu0 %1605
        %1609 = vset.pattern.permute.xlu0 0
        %1610 = vperm.xlu0 %1609, %v1572
        %v1611 = vpop.permute.xlu0 %1610
        %vm1613 = vcmp.ge.f32.partialorder %v1171, %v1576
        %vm1614 = vcmp.ge.f32.partialorder %v1172, %v1581
        %vm1615 = vcmp.ge.f32.partialorder %v1173, %v1586
        %vm1616 = vcmp.ge.f32.partialorder %v1174, %v1591
        %vm1617 = vcmp.ge.f32.partialorder %v1175, %v1596
        %vm1618 = vcmp.ge.f32.partialorder %v1176, %v1601
        %vm1619 = vcmp.ge.f32.partialorder %v1177, %v1606
        %vm1620 = vcmp.ge.f32.partialorder %v1178, %v1611
        %v1621 = vsel %vm1613, 1, 0
        %v1622 = vsel %vm1614, 1, 0
        %v1623 = vsel %vm1615, 1, 0
        %v1624 = vsel %vm1616, 1, 0
        %v1625 = vsel %vm1617, 1, 0
        %v1626 = vsel %vm1618, 1, 0
        %v1627 = vsel %vm1619, 1, 0
        %v1628 = vsel %vm1620, 1, 0
        %v1629 = vcvt.s32.f32 %v1621
        %v1630 = vcvt.s32.f32 %v1622
        %v1631 = vcvt.s32.f32 %v1623
        %v1632 = vcvt.s32.f32 %v1624
        %v1633 = vcvt.s32.f32 %v1625
        %v1634 = vcvt.s32.f32 %v1626
        %v1635 = vcvt.s32.f32 %v1627
        %v1636 = vcvt.s32.f32 %v1628
        %v1637 = vpack.c.bf16 %v1630, %v1629
        %v1638 = vpack.c.bf16 %v1632, %v1631
        %v1639 = vpack.c.bf16 %v1634, %v1633
        %v1640 = vpack.c.bf16 %v1636, %v1635
        %v1642 = vsel %vm352, %v1637, 0
        %v1645 = vsel %vm352, %v1638, 0
        %v1648 = vsel %vm352, %v1639, 0
        %v1651 = vsel %vm352, %v1640, 0
        %1653 = vmatprep.subr.bf16.mxu0 0
        %1654 = vmatpush1.bf16.msra.mxu0 0
        %1655 = vmatprep.subr.bf16.mxu0 0
        %1656 = vmatpush1.bf16.msra.mxu0 0
        %1657 = vmatprep.subr.bf16.mxu0 0
        %1658 = vmatpush1.bf16.msra.mxu0 0
        %1659 = vmatprep.subr.bf16.mxu0 0
        %1660 = vmatpush1.bf16.msra.mxu0 0
        %1661 = vmatprep.subr.bf16.mxu0 0
        %1662 = vmatpush1.bf16.msra.mxu0 1065369472
        %1663 = vmatprep.subr.bf16.mxu0 0
        %1664 = vmatpush1.bf16.msra.mxu0 1065369472
        %1665 = vmatprep.subr.bf16.mxu0 0
        %1666 = vmatpush1.bf16.msra.mxu0 1065369472
        %1667 = vmatprep.subr.bf16.mxu0 0
        %1668 = vmatpush1.bf16.msra.mxu0 1065369472
        %1669 = vmatprep.subr.bf16.mxu0 0
        %1670 = vmatpush2.bf16.msra.mxu0 0
        %1671 = vmatprep.subr.bf16.mxu0 0
        %1672 = vmatpush2.bf16.msra.mxu0 0
        %1673 = vmatprep.subr.bf16.mxu0 0
        %1674 = vmatpush2.bf16.msra.mxu0 0
        %1675 = vmatprep.subr.bf16.mxu0 0
        %1676 = vmatpush2.bf16.msra.mxu0 0
        %1677 = vmatprep.subr.bf16.mxu0 0
        %1678 = vmatpush2.bf16.msra.mxu0 0
        %1679 = vmatprep.subr.bf16.mxu0 0
        %1680 = vmatpush2.bf16.msra.mxu0 0
        %1681 = vmatprep.subr.bf16.mxu0 0
        %1682 = vmatpush2.bf16.msra.mxu0 0
        %1683 = vmatprep.subr.bf16.mxu0 0
        %1684 = vmatpush2.bf16.msra.mxu0 0
        %1685 = vmatprep.mubr.bf16.mxu0 0
        %1686 = vmatmul.mubr.bf16.gmra.mxu0 %v1642
        %v1687 = vpop.f32.mrf.mxu0
        %v1688 = vadd.f32 0.0, %v1687
        %v1689 = vpop.f32.mrf.mxu0
        %v1690 = vpop.f32.mrf.mxu0
        %v1691 = vadd.f32 0.0, %v1690
        %v1692 = vpop.f32.mrf.mxu0
        %1693 = vmatprep.mubr.bf16.mxu0 0
        %1694 = vmatmul.mubr.bf16.gmra.mxu0 %v1645
        %v1695 = vpop.f32.mrf.mxu0
        %v1696 = vadd.f32 0.0, %v1695
        %v1697 = vpop.f32.mrf.mxu0
        %v1698 = vpop.f32.mrf.mxu0
        %v1699 = vadd.f32 0.0, %v1698
        %v1700 = vpop.f32.mrf.mxu0
        %1701 = vmatprep.mubr.bf16.mxu0 0
        %1702 = vmatmul.mubr.bf16.gmra.mxu0 %v1648
        %v1703 = vpop.f32.mrf.mxu0
        %v1704 = vadd.f32 0.0, %v1703
        %v1705 = vpop.f32.mrf.mxu0
        %v1706 = vpop.f32.mrf.mxu0
        %v1707 = vadd.f32 0.0, %v1706
        %v1708 = vpop.f32.mrf.mxu0
        %1709 = vmatprep.mubr.bf16.mxu0 0
        %1710 = vmatmul.mubr.bf16.gmra.mxu0 %v1651
        %v1711 = vpop.f32.mrf.mxu0
        %v1712 = vadd.f32 0.0, %v1711
        %v1713 = vpop.f32.mrf.mxu0
        %v1714 = vpop.f32.mrf.mxu0
        %v1715 = vadd.f32 0.0, %v1714
        %v1716 = vpop.f32.mrf.mxu0
        %1717 = vdwg.mxu0
        %v1718 = vsel %vm1613, -inf, %v1171
        %v1719 = vsel %vm1614, -inf, %v1172
        %v1720 = vsel %vm1615, -inf, %v1173
        %v1721 = vsel %vm1616, -inf, %v1174
        %v1722 = vsel %vm1617, -inf, %v1175
        %v1723 = vsel %vm1618, -inf, %v1176
        %v1724 = vsel %vm1619, -inf, %v1177
        %v1725 = vsel %vm1620, -inf, %v1178
        %v1726 = vsel %vm352, %v1718, -inf
        %1727 = vmax.xlane.f32.xlu0 %v1726
        %v1728 = vpop.xlane.xlu0 %1727
        %v1729 = vsel %vm352, %v1719, -inf
        %1730 = vmax.xlane.f32.xlu0 %v1729
        %v1731 = vpop.xlane.xlu0 %1730
        %v1732 = vsel %vm352, %v1720, -inf
        %1733 = vmax.xlane.f32.xlu0 %v1732
        %v1734 = vpop.xlane.xlu0 %1733
        %v1735 = vsel %vm352, %v1721, -inf
        %1736 = vmax.xlane.f32.xlu0 %v1735
        %v1737 = vpop.xlane.xlu0 %1736
        %v1738 = vsel %vm352, %v1722, -inf
        %1739 = vmax.xlane.f32.xlu0 %v1738
        %v1740 = vpop.xlane.xlu0 %1739
        %v1741 = vsel %vm352, %v1723, -inf
        %1742 = vmax.xlane.f32.xlu0 %v1741
        %v1743 = vpop.xlane.xlu0 %1742
        %v1744 = vsel %vm352, %v1724, -inf
        %1745 = vmax.xlane.f32.xlu0 %v1744
        %v1746 = vpop.xlane.xlu0 %1745
        %v1747 = vsel %vm352, %v1725, -inf
        %1748 = vmax.xlane.f32.xlu0 %v1747
        %v1749 = vpop.xlane.xlu0 %1748
        %vm1750 = vcmp.ge.f32.partialorder %v1688, 4.0
        %vm1751 = vcmp.ge.f32.partialorder %v1691, 4.0
        %vm1752 = vcmp.ge.f32.partialorder %v1696, 4.0
        %vm1753 = vcmp.ge.f32.partialorder %v1699, 4.0
        %vm1754 = vcmp.ge.f32.partialorder %v1704, 4.0
        %vm1755 = vcmp.ge.f32.partialorder %v1707, 4.0
        %vm1756 = vcmp.ge.f32.partialorder %v1712, 4.0
        %vm1757 = vcmp.ge.f32.partialorder %v1715, 4.0
        %v1758 = vsel %vm1750, %v1565, %v1728
        %v1759 = vsel %vm1751, %v1566, %v1731
        %v1760 = vsel %vm1752, %v1567, %v1734
        %v1761 = vsel %vm1753, %v1568, %v1737
        %v1762 = vsel %vm1754, %v1569, %v1740
        %v1763 = vsel %vm1755, %v1570, %v1743
        %v1764 = vsel %vm1756, %v1571, %v1746
        %v1765 = vsel %vm1757, %v1572, %v1749
        %1767 = vset.pattern.permute.xlu0 0
        %1768 = vperm.xlu0 %1767, %v1758
        %v1769 = vpop.permute.xlu0 %1768
        %1772 = vset.pattern.permute.xlu0 0
        %1773 = vperm.xlu0 %1772, %v1759
        %v1774 = vpop.permute.xlu0 %1773
        %1777 = vset.pattern.permute.xlu0 0
        %1778 = vperm.xlu0 %1777, %v1760
        %v1779 = vpop.permute.xlu0 %1778
        %1782 = vset.pattern.permute.xlu0 0
        %1783 = vperm.xlu0 %1782, %v1761
        %v1784 = vpop.permute.xlu0 %1783
        %1787 = vset.pattern.permute.xlu0 0
        %1788 = vperm.xlu0 %1787, %v1762
        %v1789 = vpop.permute.xlu0 %1788
        %1792 = vset.pattern.permute.xlu0 0
        %1793 = vperm.xlu0 %1792, %v1763
        %v1794 = vpop.permute.xlu0 %1793
        %1797 = vset.pattern.permute.xlu0 0
        %1798 = vperm.xlu0 %1797, %v1764
        %v1799 = vpop.permute.xlu0 %1798
        %1802 = vset.pattern.permute.xlu0 0
        %1803 = vperm.xlu0 %1802, %v1765
        %v1804 = vpop.permute.xlu0 %1803
        %vm1806 = vcmp.lt.f32.partialorder %v1171, %v1769
        %vm1807 = vcmp.lt.f32.partialorder %v1172, %v1774
        %vm1808 = vcmp.lt.f32.partialorder %v1173, %v1779
        %vm1809 = vcmp.lt.f32.partialorder %v1174, %v1784
        %vm1810 = vcmp.lt.f32.partialorder %v1175, %v1789
        %vm1811 = vcmp.lt.f32.partialorder %v1176, %v1794
        %vm1812 = vcmp.lt.f32.partialorder %v1177, %v1799
        %vm1813 = vcmp.lt.f32.partialorder %v1178, %v1804
        %v1814 = vsel %vm1806, %v1181, %v1171
        %v1815 = vsel %vm1807, %v1184, %v1172
        %v1816 = vsel %vm1808, %v1187, %v1173
        %v1817 = vsel %vm1809, %v1190, %v1174
        %v1818 = vsel %vm1810, %v1193, %v1175
        %v1819 = vsel %vm1811, %v1196, %v1176
        %v1820 = vsel %vm1812, %v1199, %v1177
        %v1821 = vsel %vm1813, %v1202, %v1178
        %v1822 = vsel %vm352, %v1814, -inf
        %v1823 = vsel %vm352, %v1815, -inf
        %v1824 = vsel %vm352, %v1816, -inf
        %v1825 = vsel %vm352, %v1817, -inf
        %v1826 = vsel %vm352, %v1818, -inf
        %v1827 = vmax.f32 %v1822, %v1826
        %v1828 = vsel %vm352, %v1819, -inf
        %v1829 = vmax.f32 %v1823, %v1828
        %v1830 = vsel %vm352, %v1820, -inf
        %v1831 = vmax.f32 %v1824, %v1830
        %v1832 = vsel %vm352, %v1821, -inf
        %v1833 = vmax.f32 %v1825, %v1832
        %v1834 = vmax.f32 %v1827, %v1829
        %v1835 = vmax.f32 %v1831, %v1833
        %v1836 = vmax.f32 %v1834, %v1835
        %v1837 = vrot.slane %v1836, 4
        %v1838 = vmax.f32 %v1836, %v1837
        %v1839 = vrot.slane %v1838, 2
        %v1840 = vmax.f32 %v1838, %v1839
        %v1841 = vrot.slane %v1840, 1
        %v1842 = vmax.f32 %v1840, %v1841
        %vm1843 = vcmask 1040384
        %v1844 = vsel %vm1843, %v373, %v434
        %vm1845 = vcmask 1041408
        %v1846 = vsel %vm1845, %v1844, %v1138
        %vm1847 = vcmask 1042432
        %v1848 = vsel %vm1847, %v1846, %v1842
        %p1849 = scmp.eq.s32.totalorder %s25, 0
        // Predicated region
        $region37: #{tpu_custom_call.1} parent=31 // pred_check
          %p1850 = pneg %p1849
        $region38: #{tpu_custom_call.1} parent=31 // pred_check_branch
          %1852 = sbr.rel (%p1850) target = $region40
        $region39: #{tpu_custom_call.1} parent=31 // pred_region
          %vm1853 = vcmask 519168
          %1854 = vst.msk [vmem:[%s256] sm:$0xf] %vm1853, %v1848
        $region40: #{tpu_custom_call.1} parent=31 // pred_fallthru
          _
        %p1855 = scmp.gt.s32.totalorder %s25, 0
        // Predicated region
        $region41: #{tpu_custom_call.1} parent=31 // pred_check
          %p1856 = pneg %p1855
        $region42: #{tpu_custom_call.1} parent=31 // pred_check_branch
          %1858 = sbr.rel (%p1856) target = $region44
        $region43: #{tpu_custom_call.1} parent=31 // pred_region
          %v1859 = vld [vmem:[%s256] sm:$0xf]
          %v1860 = vmax.f32 %v1859, %v1848
          %vm1861 = vcmask 519168
          %1862 = vst.msk [vmem:[%s256] sm:$0xf] %vm1861, %v1860
        $region44: #{tpu_custom_call.1} parent=31 // pred_fallthru
          _
        %s1863 = sand.u32 %s124, 1
        %s1864 = scalar_lea.sflag [#allocation4], %s1863
        %s1865 = sand.u32 %s124, 1
        %s1866 = smul.addr %s1865, 4
        %s1867 = scalar_lea.vmem [#allocation5], %s1866
        // Predicated region
        $region45: #{tpu_custom_call.1} parent=31 // pred_check
          %p1868 = pneg %p134
        $region46: #{tpu_custom_call.1} parent=31 // pred_check_branch
          %1870 = sbr.rel (%p1868) target = $region48
        $region47: #{tpu_custom_call.1} parent=31 // pred_region
          %s1872 = ssub.s32 64, 64
          %1873 = vsyncadd %s1864, %s1872
          %s1874 = smul.addr %s24, 64
          %s1875 = scalar_lea.hbm %s3, %s1874
          %s1877 = sshll.u32 %s1867, 4
          %s1878 = int_to_ptr.vmem [resolvable:$true] %s1877
          %1880 = dma.vmem_to_hbm [thread:$0]  %s1878, 64, %s1875, %s1864
        $region48: #{tpu_custom_call.1} parent=31 // pred_fallthru
          _
      $region32: #{tpu_custom_call.1} parent=5 // pred_fallthru
        _
      %p1881 = scmp.le.s32.totalorder 2, %s15
      // Predicated region
      $region49: #{tpu_custom_call.1} parent=5 // pred_check
        %p1882 = pneg %p1881
      $region50: #{tpu_custom_call.1} parent=5 // pred_check_branch
        %1884 = sbr.rel (%p1882) target = $region52
      $region51: #{tpu_custom_call.1} parent=5 // pred_region
        %s1885 = ssub.s32 %s15, 2
        // Predicated region
        $region53: #{tpu_custom_call.1} parent=51 // pred_check
          %p1886 = pneg %p140
        $region54: #{tpu_custom_call.1} parent=51 // pred_check_branch
          %1888 = sbr.rel (%p1886) target = $region56
        $region55: #{tpu_custom_call.1} parent=51 // pred_region
          %s1889 = sand.u32 %s125, 1
          %s1890 = scalar_lea.sflag [#allocation4], %s1889
          %s1891 = sand.u32 %s125, 1
          %s1892 = smul.addr %s1891, 4
          %s1893 = scalar_lea.vmem [#allocation5], %s1892
          %1894 = dma.done %s1890, 64
        $region56: #{tpu_custom_call.1} parent=51 // pred_fallthru
          _
      $region52: #{tpu_custom_call.1} parent=5 // pred_fallthru
        _
    $region6: #{tpu_custom_call.1} parent=1 // loop_footer
      %s19 = sadd.s32 1, %s15
    $region7: #{tpu_custom_call.1} parent=1 // loop_footer_branch
      %14 = sbr.rel target = $region3
    $region8: #{tpu_custom_call.1} parent=1 // loop_exit
      _
    %1895 = vsyncpa [#allocation3], 1
    %s1896 = scalar_lea.sflag [#allocation3], 1
    %1897 = vsyncpa %s1896, 1
    %1898 = vsyncpa [#allocation4], 1
    %s1899 = scalar_lea.sflag [#allocation4], 1
    %1900 = vsyncpa %s1899, 1

</llo_original>
